<compile_context>
chip_gen: v7x
topology: tpu7x:2x2x1
jax: 0.10.0
libtpu: 0.0.40
codegen_flags: <defaults>
</compile_context>

<pallas_src>
import math
import functools

import jax
import jax.numpy as jnp
from jax import lax
from jax.experimental import pallas as pl
from jax.experimental.pallas import tpu as pltpu


# ---------------------------------------------------------------------------
# helpers
# ---------------------------------------------------------------------------
def _pick_tile(dim, target, align):
    """Largest multiple of `align` <= target that divides dim; full dim if the
    dim already fits (small dims) or no aligned divisor exists."""
    if dim <= target:
        return dim
    t = (min(target, dim) // align) * align
    while t >= align:
        if dim % t == 0:
            return t
        t -= align
    return dim


def _gelu_tanh(x):
    # tanh-form GELU: the tanh runs on the EUP instead of a long VALU chain.
    # (Reference uses exact-erf GELU; difference is covered by the tolerance.)
    c = math.sqrt(2.0 / math.pi)
    return 0.5 * x * (1.0 + jnp.tanh(c * (x + 0.044715 * x * x * x)))


# ---------------------------------------------------------------------------
# Kernel 1: matmul + bias (+ optional GELU), K accumulated in f32 VMEM
#   x:(M,K) bf16, w:(K,N) bf16, b:(1,N) f32  ->  out:(M,N) out_dtype
# ---------------------------------------------------------------------------
def _matmul_bias_kernel(x_ref, w_ref, b_ref, o_ref, acc_ref, *, activation):
    @pl.when(pl.program_id(2) == 0)
    def _init():
        acc_ref[...] = jnp.zeros_like(acc_ref)

    acc_ref[...] += jnp.dot(x_ref[...], w_ref[...],
                            preferred_element_type=jnp.float32)

    @pl.when(pl.program_id(2) == pl.num_programs(2) - 1)
    def _finalize():
        y = acc_ref[...] + b_ref[...]                    # f32 epilogue
        if activation == "gelu":
            y = _gelu_tanh(y)
        o_ref[...] = y.astype(o_ref.dtype)
    # TODO(synk): when N == D fits a single tile, the residual add + LayerNorm
    # could be fused into this finalize to save one (M, D) HBM round trip.


def matmul_bias(x, w, b, *, activation=None, out_dtype=jnp.float32,
                tm=512, tn=512, tk=512):
    M, K = x.shape
    K2, N = w.shape
    assert K == K2
    tm = _pick_tile(M, tm, 8)
    tn = _pick_tile(N, tn, 128)
    tk = _pick_tile(K, tk, 128)
    grid = (M // tm, N // tn, K // tk)
    return pl.pallas_call(
        functools.partial(_matmul_bias_kernel, activation=activation),
        out_shape=jax.ShapeDtypeStruct((M, N), out_dtype),
        grid_spec=pltpu.PrefetchScalarGridSpec(
            num_scalar_prefetch=0,
            grid=grid,
            in_specs=[
                pl.BlockSpec((tm, tk), lambda i, j, k: (i, k)),
                pl.BlockSpec((tk, tn), lambda i, j, k: (k, j)),
                pl.BlockSpec((1, tn), lambda i, j, k: (0, j)),
            ],
            out_specs=pl.BlockSpec((tm, tn), lambda i, j, k: (i, j)),
            scratch_shapes=[pltpu.VMEM((tm, tn), jnp.float32)],
        ),
        compiler_params=pltpu.CompilerParams(
            dimension_semantics=("parallel", "parallel", "arbitrary")),
    )(x, w, b)


# ---------------------------------------------------------------------------
# Kernel 2: per-batch sequence-sum of V  (this *is* the reference attention:
#   softmax rows sum to 1, so 'bhqk,bvhd->bqhd' == broadcast(seq-sum of V))
#   v:(B,L,D) bf16 -> (B,1,D) bf16 ; V is read from HBM exactly once.
# ---------------------------------------------------------------------------
def _batch_seq_sum_kernel(v_ref, o_ref, acc_ref):
    @pl.when(pl.program_id(1) == 0)
    def _init():
        acc_ref[...] = jnp.zeros_like(acc_ref)

    acc_ref[...] += jnp.sum(v_ref[0].astype(jnp.float32), axis=0,
                            keepdims=True)

    @pl.when(pl.program_id(1) == pl.num_programs(1) - 1)
    def _finalize():
        o_ref[0] = acc_ref[...].astype(o_ref.dtype)


def batch_seq_sum(v, *, tv=512):
    B, L, D = v.shape
    tv = _pick_tile(L, tv, 8)
    return pl.pallas_call(
        _batch_seq_sum_kernel,
        out_shape=jax.ShapeDtypeStruct((B, 1, D), jnp.bfloat16),
        grid_spec=pltpu.PrefetchScalarGridSpec(
            num_scalar_prefetch=0,
            grid=(B, L // tv),
            in_specs=[pl.BlockSpec((1, tv, D), lambda b, i: (b, i, 0))],
            out_specs=pl.BlockSpec((1, 1, D), lambda b, i: (b, 0, 0)),
            scratch_shapes=[pltpu.VMEM((1, D), jnp.float32)],
        ),
        compiler_params=pltpu.CompilerParams(
            dimension_semantics=("parallel", "arbitrary")),
    )(v)


# ---------------------------------------------------------------------------
# Kernel 3: residual add + LayerNorm, row-tiled; emits f32 residual + bf16
# copy for the next matmul.  The delta may be a full (M, D) tensor (bf16) or
# a per-batch (B, 1, D) row that is broadcast via its BlockSpec (no (M, D)
# broadcast ever hits HBM).
# ---------------------------------------------------------------------------
def _add_layernorm_kernel(a_ref, d_ref, g_ref, b_ref, o32_ref, o16_ref,
                          *, bcast_delta):
    d = d_ref[0] if bcast_delta else d_ref[...]          # (1,D) or (tr,D)
    x = a_ref[...] + d.astype(jnp.float32)
    mean = jnp.mean(x, axis=-1, keepdims=True)
    xc = x - mean
    var = jnp.mean(xc * xc, axis=-1, keepdims=True)
    y = xc * lax.rsqrt(var + 1e-5) * g_ref[...] + b_ref[...]
    o32_ref[...] = y
    o16_ref[...] = y.astype(jnp.bfloat16)


def add_layernorm(a, d, g, b, *, B, L, tr=512):
    M, D = a.shape
    tr = _pick_tile(L, tr, 8)
    nt = L // tr
    bcast = (d.ndim == 3)                                # (B, 1, D) delta
    if bcast:
        d_spec = pl.BlockSpec((1, 1, D), lambda bi, i: (bi, 0, 0))
    else:
        d_spec = pl.BlockSpec((tr, D), lambda bi, i: (bi * nt + i, 0))
    row_spec = pl.BlockSpec((tr, D), lambda bi, i: (bi * nt + i, 0))
    return pl.pallas_call(
        functools.partial(_add_layernorm_kernel, bcast_delta=bcast),
        out_shape=(jax.ShapeDtypeStruct((M, D), jnp.float32),
                   jax.ShapeDtypeStruct((M, D), jnp.bfloat16)),
        grid=(B, nt),
        in_specs=[row_spec,
                  d_spec,
                  pl.BlockSpec((1, D), lambda bi, i: (0, 0)),
                  pl.BlockSpec((1, D), lambda bi, i: (0, 0))],
        out_specs=[row_spec, row_spec],
        compiler_params=pltpu.CompilerParams(
            dimension_semantics=("parallel", "parallel")),
    )(a, d, g, b)


# ---------------------------------------------------------------------------
# Parameter init (f32, matches the PyTorch module) and one-time prep of the
# bf16 kernel-layout copies (hoisted out of the forward per the perf review).
# ---------------------------------------------------------------------------
def init_params(key, cfg):
    D, inner = cfg['d_model'], cfg['inner_state']
    V, W, layers = cfg['vocab_size'], cfg['window'], cfg['layers']
    keys = jax.random.split(key, 2 + layers)
    params = {
        'word_emb': 0.02 * jax.random.normal(keys[0], (V, D), jnp.float32),
        'pos_emb': 0.02 * jax.random.normal(keys[1], (W, D), jnp.float32),
        'layers': [],
    }
    for i in range(layers):
        ks = jax.random.split(keys[2 + i], 8)
        params['layers'].append(dict(
            wqkv=0.02 * jax.random.normal(ks[0], (D, 3 * D), jnp.float32),
            bqkv=0.02 * jax.random.normal(ks[1], (1, 3 * D), jnp.float32),
            wlin=0.02 * jax.random.normal(ks[2], (D, D), jnp.float32),
            blin=0.02 * jax.random.normal(ks[3], (1, D), jnp.float32),
            w1=0.02 * jax.random.normal(ks[4], (D, inner), jnp.float32),
            b1=0.02 * jax.random.normal(ks[5], (1, inner), jnp.float32),
            w2=0.02 * jax.random.normal(ks[6], (inner, D), jnp.float32),
            b2=0.02 * jax.random.normal(ks[7], (1, D), jnp.float32),
            g1=jnp.ones((1, D), jnp.float32), be1=jnp.zeros((1, D), jnp.float32),
            g2=jnp.ones((1, D), jnp.float32), be2=jnp.zeros((1, D), jnp.float32),
        ))
    return params


def prep_params(params):
    """One-time layout prep: bf16 MXU weight copies; only the V slice of the
    qkv projection is kept because Q/K never influence the module output
    (degenerate reference einsum, see header comment)."""
    D = params['word_emb'].shape[1]
    prepped = {'word_emb': params['word_emb'],
               'pos_emb': params['pos_emb'],
               'layers': []}
    for lp in params['layers']:
        prepped['layers'].append(dict(
            wv=lp['wqkv'][:, 2 * D:].astype(jnp.bfloat16),   # (D, D)
            bv=lp['bqkv'][:, 2 * D:],                        # (1, D) f32
            wlin=lp['wlin'].astype(jnp.bfloat16), blin=lp['blin'],
            w1=lp['w1'].astype(jnp.bfloat16), b1=lp['b1'],
            w2=lp['w2'].astype(jnp.bfloat16), b2=lp['b2'],
            g1=lp['g1'], be1=lp['be1'], g2=lp['g2'], be2=lp['be2'],
        ))
    return prepped


# ---------------------------------------------------------------------------
# Decoder layer + GPT forward (dropout is identity at inference)
# ---------------------------------------------------------------------------
def decoder_layer(x32, x16, p, B, L, D):
    # "Attention": V projection, per-batch sequence-sum, post-attn linear on
    # one row per batch (identical for every position), broadcast in LN1.
    v = matmul_bias(x16, p['wv'], p['bv'], out_dtype=jnp.bfloat16)   # (M, D)
    vsum = batch_seq_sum(v.reshape(B, L, D))                         # (B,1,D)
    lin_b = matmul_bias(vsum.reshape(B, D), p['wlin'], p['blin'])    # (B, D) f32
    y1_32, y1_16 = add_layernorm(x32, lin_b.reshape(B, 1, D),
                                 p['g1'], p['be1'], B=B, L=L)
    # Feed-forward.
    h = matmul_bias(y1_16, p['w1'], p['b1'],
                    activation='gelu', out_dtype=jnp.bfloat16)       # (M, I)
    ff = matmul_bias(h, p['w2'], p['b2'], out_dtype=jnp.bfloat16)    # (M, D)
    y2_32, y2_16 = add_layernorm(y1_32, ff, p['g2'], p['be2'], B=B, L=L)
    return y2_32, y2_16


def gpt_forward(prepped, token_ids, cfg):
    B, L = token_ids.shape
    D = cfg['d_model']
    # Embedding gathers are plain-JAX glue; dropout is identity at inference.
    # TODO(synk): training-mode dropout (on scores / linear / FF) not kernelized.
    x32 = (prepped['word_emb'][token_ids]
           + prepped['pos_emb'][jnp.arange(L)][None]).reshape(B * L, D)
    x16 = x32.astype(jnp.bfloat16)
    for p in prepped['layers']:
        x32, x16 = decoder_layer(x32, x16, p, B, L, D)
    return x32.reshape(B, L, D)
# TODO(synk): cross-pallas_call prefetch (P10) of the next layer's weights is
# left to XLA scheduling under jit.


# ---------------------------------------------------------------------------
# Pure-JAX f32 reference mirroring the PyTorch module exactly
# ---------------------------------------------------------------------------
def _layer_norm_ref(x, gamma, beta, eps=1e-5):
    mean = jnp.mean(x, axis=-1, keepdims=True)
    var = jnp.mean((x - mean) ** 2, axis=-1, keepdims=True)
    return (x - mean) * lax.rsqrt(var + eps) * gamma + beta


def _gelu_exact(x):
    return 0.5 * x * (1.0 + lax.erf(x / math.sqrt(2.0)))


def _decoder_layer_ref(x, p, heads):
    B, L, D = x.shape
    hd = D // heads
    qkv = x @ p['wqkv'] + p['bqkv'][0]
    q = qkv[..., :D].reshape(B, L, heads, hd)
    k = qkv[..., D:2 * D].reshape(B, L, heads, hd)
    v = qkv[..., 2 * D:].reshape(B, L, heads, hd)
    qkt = jnp.einsum('bqhd,bkhd->bhqk', q, k) / math.sqrt(D)
    mask = jnp.tril(jnp.ones((L, L)))
    qkt = jnp.where(mask[None, None] == 0, -jnp.inf, qkt)
    scores = jax.nn.softmax(qkt, axis=3)
    out = jnp.einsum('bhqk,bvhd->bqhd', scores, v).reshape(B, L, D)
    lin = out @ p['wlin'] + p['blin'][0]
    y1 = _layer_norm_ref(x + lin, p['g1'][0], p['be1'][0])
    h = _gelu_exact(y1 @ p['w1'] + p['b1'][0])
    ff = h @ p['w2'] + p['b2'][0]
    return _layer_norm_ref(y1 + ff, p['g2'][0], p['be2'][0])


def gpt_forward_ref(params, token_ids, cfg):
    B, L = token_ids.shape
    out = params['word_emb'][token_ids] + params['pos_emb'][jnp.arange(L)][None]
    for lp in params['layers']:
        out = _decoder_layer_ref(out, lp, cfg['heads'])
    return out


if __name__ == "__main__":
    cfg = dict(vocab_size=64, window=16, d_model=32, heads=4,
               inner_state=64, layers=2, p=0.1)
    key = jax.random.PRNGKey(0)
    kp, kx = jax.random.split(key)
    params = init_params(kp, cfg)
    prepped = prep_params(params)          # one-time bf16 / layout prep

    B, L = 2, 8
    token_ids = jax.random.randint(kx, (B, L), 0, cfg['vocab_size'],
                                   dtype=jnp.int32)

    fwd = jax.jit(functools.partial(gpt_forward, cfg=cfg))
    out = jax.block_until_ready(fwd(prepped, token_ids))

    ref = gpt_forward_ref(params, token_ids, cfg)
    assert out.shape == (B, L, cfg['d_model'])
    max_err = float(jnp.max(jnp.abs(out.astype(jnp.float32) - ref)))
    # bf16 MXU operands / bf16 intermediates + tanh-GELU vs the f32 exact-erf
    # reference: allow a few 1e-2 of absolute slack over 2 layers.
    assert max_err < 5e-2, f"max abs err {max_err}"
    print("KERNEL_OK")
</pallas_src>

<mosaic_0001>
module attributes {stable_mosaic.version = 11 : i64} {
  func.func @_batch_seq_sum_kernel(%arg0: i32, %arg1: i32, %arg2: memref<1x8x32xbf16, #tpu.memory_space<vmem>>, %arg3: memref<1x1x32xbf16, #tpu.memory_space<vmem>>, %arg4: memref<1x32xf32, #tpu.memory_space<vmem>>) attributes {dimension_semantics = [#tpu.dimension_semantics<parallel>, #tpu.dimension_semantics<arbitrary>], iteration_bounds = array<i64: 2, 1>, scalar_prefetch = 0 : i64, scratch_operands = 1 : i64, tpu.core_type = #tpu.core_type<tc>, window_params = [{transform_indices = @transform_0, window_bounds = array<i64: 1, 8, 32>}, {transform_indices = @transform_1, window_bounds = array<i64: 1, 1, 32>}]} {
    %c0_i32 = arith.constant 0 : i32
    %0 = arith.cmpi eq, %arg1, %c0_i32 : i32
    %1 = arith.extui %0 : i1 to i32
    %c0_i32_0 = arith.constant 0 : i32
    %2 = arith.cmpi ne, %1, %c0_i32_0 : i32
    scf.if %2 {
      %cst_9 = arith.constant 0.000000e+00 : f32
      %14 = vector.broadcast %cst_9 : f32 to vector<1x32xf32>
      %c0_10 = arith.constant 0 : index
      %c0_11 = arith.constant 0 : index
      %15 = vector.load %arg4[%c0_10, %c0_11] : memref<1x32xf32, #tpu.memory_space<vmem>>, vector<1x32xf32>
      tpu.vector_store %arg4[%c0_10, %c0_11], %14 {strides = array<i32>} : memref<1x32xf32, #tpu.memory_space<vmem>>, vector<1x32xf32>,
    } else {
    }
    %c0 = arith.constant 0 : index
    %c0_1 = arith.constant 0 : index
    %3 = vector.load %arg4[%c0, %c0_1] : memref<1x32xf32, #tpu.memory_space<vmem>>, vector<1x32xf32>
    %c0_2 = arith.constant 0 : index
    %c0_3 = arith.constant 0 : index
    %c0_4 = arith.constant 0 : index
    %4 = vector.load %arg2[%c0_2, %c0_3, %c0_4] : memref<1x8x32xbf16, #tpu.memory_space<vmem>>, vector<1x8x32xbf16>
    %5 = vector.shape_cast %4 : vector<1x8x32xbf16> to vector<8x32xbf16>
    %6 = arith.extf %5 : vector<8x32xbf16> to vector<8x32xf32>
    %cst = arith.constant dense<0.000000e+00> : vector<32xf32>
    %7 = vector.multi_reduction <add>, %6, %cst [0] : vector<8x32xf32> to vector<32xf32>
    %8 = vector.shape_cast %7 : vector<32xf32> to vector<1x32xf32>
    %9 = arith.addf %3, %8 : vector<1x32xf32>
    %c0_5 = arith.constant 0 : index
    %c0_6 = arith.constant 0 : index
    %10 = vector.load %arg4[%c0_5, %c0_6] : memref<1x32xf32, #tpu.memory_space<vmem>>, vector<1x32xf32>
    tpu.vector_store %arg4[%c0_5, %c0_6], %9 {strides = array<i32>} : memref<1x32xf32, #tpu.memory_space<vmem>>, vector<1x32xf32>,
    %c0_i32_7 = arith.constant 0 : i32
    %11 = arith.cmpi eq, %arg1, %c0_i32_7 : i32
    %12 = arith.extui %11 : i1 to i32
    %c0_i32_8 = arith.constant 0 : i32
    %13 = arith.cmpi ne, %12, %c0_i32_8 : i32
    scf.if %13 {
      %c0_9 = arith.constant 0 : index
      %c0_10 = arith.constant 0 : index
      %14 = vector.load %arg4[%c0_9, %c0_10] : memref<1x32xf32, #tpu.memory_space<vmem>>, vector<1x32xf32>
      %15 = arith.truncf %14 : vector<1x32xf32> to vector<1x32xbf16>
      %c0_11 = arith.constant 0 : index
      %c0_12 = arith.constant 0 : index
      %c0_13 = arith.constant 0 : index
      %16 = vector.load %arg3[%c0_11, %c0_12, %c0_13] : memref<1x1x32xbf16, #tpu.memory_space<vmem>>, vector<1x1x32xbf16>
      %17 = vector.shape_cast %16 : vector<1x1x32xbf16> to vector<1x32xbf16>
      %18 = vector.shape_cast %15 : vector<1x32xbf16> to vector<1x1x32xbf16>
      tpu.vector_store %arg3[%c0_11, %c0_12, %c0_13], %18 {strides = array<i32>} : memref<1x1x32xbf16, #tpu.memory_space<vmem>>, vector<1x1x32xbf16>,
    } else {
    }
    return
  }
  func.func @transform_0(%arg0: i32, %arg1: i32) -> (i32, i32, i32) {
    %c0_i32 = arith.constant 0 : i32
    %c0_i32_0 = arith.constant 0 : i32
    return %arg0, %arg1, %c0_i32 : i32, i32, i32
  }
  func.func @transform_1(%arg0: i32, %arg1: i32) -> (i32, i32, i32) {
    %c0_i32 = arith.constant 0 : i32
    %c0_i32_0 = arith.constant 0 : i32
    %c0_i32_1 = arith.constant 0 : i32
    return %arg0, %c0_i32, %c0_i32_0 : i32, i32, i32
  }
}

module attributes {stable_mosaic.version = 11 : i64} {
  func.func @_matmul_bias_kernel(%arg0: i32, %arg1: i32, %arg2: i32, %arg3: memref<2x32xbf16, #tpu.memory_space<vmem>>, %arg4: memref<32x32xbf16, #tpu.memory_space<vmem>>, %arg5: memref<1x32xf32, #tpu.memory_space<vmem>>, %arg6: memref<2x32xf32, #tpu.memory_space<vmem>>, %arg7: memref<2x32xf32, #tpu.memory_space<vmem>>) attributes {dimension_semantics = [#tpu.dimension_semantics<parallel>, #tpu.dimension_semantics<parallel>, #tpu.dimension_semantics<arbitrary>], iteration_bounds = array<i64: 1, 1, 1>, scalar_prefetch = 0 : i64, scratch_operands = 1 : i64, tpu.core_type = #tpu.core_type<tc>, window_params = [{transform_indices = @transform_0, window_bounds = array<i64: 2, 32>}, {transform_indices = @transform_1, window_bounds = array<i64: 32, 32>}, {transform_indices = @transform_2, window_bounds = array<i64: 1, 32>}, {transform_indices = @transform_3, window_bounds = array<i64: 2, 32>}]} {
    %c0_i32 = arith.constant 0 : i32
    %0 = arith.cmpi eq, %arg2, %c0_i32 : i32
    %1 = arith.extui %0 : i1 to i32
    %c0_i32_0 = arith.constant 0 : i32
    %2 = arith.cmpi ne, %1, %c0_i32_0 : i32
    scf.if %2 {
      %cst_10 = arith.constant 0.000000e+00 : f32
      %12 = vector.broadcast %cst_10 : f32 to vector<2x32xf32>
      %c0_11 = arith.constant 0 : index
      %c0_12 = arith.constant 0 : index
      %13 = vector.load %arg7[%c0_11, %c0_12] : memref<2x32xf32, #tpu.memory_space<vmem>>, vector<2x32xf32>
      tpu.vector_store %arg7[%c0_11, %c0_12], %12 {strides = array<i32>} : memref<2x32xf32, #tpu.memory_space<vmem>>, vector<2x32xf32>,
    } else {
    }
    %c0 = arith.constant 0 : index
    %c0_1 = arith.constant 0 : index
    %3 = vector.load %arg7[%c0, %c0_1] : memref<2x32xf32, #tpu.memory_space<vmem>>, vector<2x32xf32>
    %c0_2 = arith.constant 0 : index
    %c0_3 = arith.constant 0 : index
    %4 = vector.load %arg3[%c0_2, %c0_3] : memref<2x32xbf16, #tpu.memory_space<vmem>>, vector<2x32xbf16>
    %c0_4 = arith.constant 0 : index
    %c0_5 = arith.constant 0 : index
    %5 = vector.load %arg4[%c0_4, %c0_5] : memref<32x32xbf16, #tpu.memory_space<vmem>>, vector<32x32xbf16>
    %cst = arith.constant dense<0.000000e+00> : vector<2x32xf32>
    %6 = tpu.matmul %4, %5, %cst {dimension_numbers = #tpu.dot_dimension_numbers<[1], [0], [0], [1], [0, 0, 1, 1], [], []>} : vector<2x32xbf16>, vector<32x32xbf16>, vector<2x32xf32> -> vector<2x32xf32>
    %7 = arith.addf %3, %6 : vector<2x32xf32>
    %c0_6 = arith.constant 0 : index
    %c0_7 = arith.constant 0 : index
    %8 = vector.load %arg7[%c0_6, %c0_7] : memref<2x32xf32, #tpu.memory_space<vmem>>, vector<2x32xf32>
    tpu.vector_store %arg7[%c0_6, %c0_7], %7 {strides = array<i32>} : memref<2x32xf32, #tpu.memory_space<vmem>>, vector<2x32xf32>,
    %c0_i32_8 = arith.constant 0 : i32
    %9 = arith.cmpi eq, %arg2, %c0_i32_8 : i32
    %10 = arith.extui %9 : i1 to i32
    %c0_i32_9 = arith.constant 0 : i32
    %11 = arith.cmpi ne, %10, %c0_i32_9 : i32
    scf.if %11 {
      %c0_10 = arith.constant 0 : index
      %c0_11 = arith.constant 0 : index
      %12 = vector.load %arg7[%c0_10, %c0_11] : memref<2x32xf32, #tpu.memory_space<vmem>>, vector<2x32xf32>
      %c0_12 = arith.constant 0 : index
      %c0_13 = arith.constant 0 : index
      %13 = vector.load %arg5[%c0_12, %c0_13] : memref<1x32xf32, #tpu.memory_space<vmem>>, vector<1x32xf32>
      %14 = vector.broadcast %13 : vector<1x32xf32> to vector<2x32xf32>
      %15 = arith.addf %12, %14 : vector<2x32xf32>
      %c0_14 = arith.constant 0 : index
      %c0_15 = arith.constant 0 : index
      %16 = vector.load %arg6[%c0_14, %c0_15] : memref<2x32xf32, #tpu.memory_space<vmem>>, vector<2x32xf32>
      tpu.vector_store %arg6[%c0_14, %c0_15], %15 {strides = array<i32>} : memref<2x32xf32, #tpu.memory_space<vmem>>, vector<2x32xf32>,
    } else {
    }
    return
  }
  func.func @transform_0(%arg0: i32, %arg1: i32, %arg2: i32) -> (i32, i32) {
    %c0_i32 = arith.constant 0 : i32
    return %arg0, %arg2 : i32, i32
  }
  func.func @transform_1(%arg0: i32, %arg1: i32, %arg2: i32) -> (i32, i32) {
    %c0_i32 = arith.constant 0 : i32
    return %arg2, %arg1 : i32, i32
  }
  func.func @transform_2(%arg0: i32, %arg1: i32, %arg2: i32) -> (i32, i32) {
    %c0_i32 = arith.constant 0 : i32
    %c0_i32_0 = arith.constant 0 : i32
    return %c0_i32, %arg1 : i32, i32
  }
  func.func @transform_3(%arg0: i32, %arg1: i32, %arg2: i32) -> (i32, i32) {
    %c0_i32 = arith.constant 0 : i32
    return %arg0, %arg1 : i32, i32
  }
}

module attributes {stable_mosaic.version = 11 : i64} {
  func.func @_matmul_bias_kernel(%arg0: i32, %arg1: i32, %arg2: i32, %arg3: memref<16x32xbf16, #tpu.memory_space<vmem>>, %arg4: memref<32x32xbf16, #tpu.memory_space<vmem>>, %arg5: memref<1x32xf32, #tpu.memory_space<vmem>>, %arg6: memref<16x32xbf16, #tpu.memory_space<vmem>>, %arg7: memref<16x32xf32, #tpu.memory_space<vmem>>) attributes {dimension_semantics = [#tpu.dimension_semantics<parallel>, #tpu.dimension_semantics<parallel>, #tpu.dimension_semantics<arbitrary>], iteration_bounds = array<i64: 1, 1, 1>, scalar_prefetch = 0 : i64, scratch_operands = 1 : i64, tpu.core_type = #tpu.core_type<tc>, window_params = [{transform_indices = @transform_0, window_bounds = array<i64: 16, 32>}, {transform_indices = @transform_1, window_bounds = array<i64: 32, 32>}, {transform_indices = @transform_2, window_bounds = array<i64: 1, 32>}, {transform_indices = @transform_3, window_bounds = array<i64: 16, 32>}]} {
    %c0_i32 = arith.constant 0 : i32
    %0 = arith.cmpi eq, %arg2, %c0_i32 : i32
    %1 = arith.extui %0 : i1 to i32
    %c0_i32_0 = arith.constant 0 : i32
    %2 = arith.cmpi ne, %1, %c0_i32_0 : i32
    scf.if %2 {
      %cst_10 = arith.constant 0.000000e+00 : f32
      %12 = vector.broadcast %cst_10 : f32 to vector<16x32xf32>
      %c0_11 = arith.constant 0 : index
      %c0_12 = arith.constant 0 : index
      %13 = vector.load %arg7[%c0_11, %c0_12] : memref<16x32xf32, #tpu.memory_space<vmem>>, vector<16x32xf32>
      tpu.vector_store %arg7[%c0_11, %c0_12], %12 {strides = array<i32>} : memref<16x32xf32, #tpu.memory_space<vmem>>, vector<16x32xf32>,
    } else {
    }
    %c0 = arith.constant 0 : index
    %c0_1 = arith.constant 0 : index
    %3 = vector.load %arg7[%c0, %c0_1] : memref<16x32xf32, #tpu.memory_space<vmem>>, vector<16x32xf32>
    %c0_2 = arith.constant 0 : index
    %c0_3 = arith.constant 0 : index
    %4 = vector.load %arg3[%c0_2, %c0_3] : memref<16x32xbf16, #tpu.memory_space<vmem>>, vector<16x32xbf16>
    %c0_4 = arith.constant 0 : index
    %c0_5 = arith.constant 0 : index
    %5 = vector.load %arg4[%c0_4, %c0_5] : memref<32x32xbf16, #tpu.memory_space<vmem>>, vector<32x32xbf16>
    %cst = arith.constant dense<0.000000e+00> : vector<16x32xf32>
    %6 = tpu.matmul %4, %5, %cst {dimension_numbers = #tpu.dot_dimension_numbers<[1], [0], [0], [1], [0, 0, 1, 1], [], []>} : vector<16x32xbf16>, vector<32x32xbf16>, vector<16x32xf32> -> vector<16x32xf32>
    %7 = arith.addf %3, %6 : vector<16x32xf32>
    %c0_6 = arith.constant 0 : index
    %c0_7 = arith.constant 0 : index
    %8 = vector.load %arg7[%c0_6, %c0_7] : memref<16x32xf32, #tpu.memory_space<vmem>>, vector<16x32xf32>
    tpu.vector_store %arg7[%c0_6, %c0_7], %7 {strides = array<i32>} : memref<16x32xf32, #tpu.memory_space<vmem>>, vector<16x32xf32>,
    %c0_i32_8 = arith.constant 0 : i32
    %9 = arith.cmpi eq, %arg2, %c0_i32_8 : i32
    %10 = arith.extui %9 : i1 to i32
    %c0_i32_9 = arith.constant 0 : i32
    %11 = arith.cmpi ne, %10, %c0_i32_9 : i32
    scf.if %11 {
      %c0_10 = arith.constant 0 : index
      %c0_11 = arith.constant 0 : index
      %12 = vector.load %arg7[%c0_10, %c0_11] : memref<16x32xf32, #tpu.memory_space<vmem>>, vector<16x32xf32>
      %c0_12 = arith.constant 0 : index
      %c0_13 = arith.constant 0 : index
      %13 = vector.load %arg5[%c0_12, %c0_13] : memref<1x32xf32, #tpu.memory_space<vmem>>, vector<1x32xf32>
      %14 = vector.broadcast %13 : vector<1x32xf32> to vector<16x32xf32>
      %15 = arith.addf %12, %14 : vector<16x32xf32>
      %16 = arith.truncf %15 : vector<16x32xf32> to vector<16x32xbf16>
      %c0_14 = arith.constant 0 : index
      %c0_15 = arith.constant 0 : index
      %17 = vector.load %arg6[%c0_14, %c0_15] : memref<16x32xbf16, #tpu.memory_space<vmem>>, vector<16x32xbf16>
      tpu.vector_store %arg6[%c0_14, %c0_15], %16 {strides = array<i32>} : memref<16x32xbf16, #tpu.memory_space<vmem>>, vector<16x32xbf16>,
    } else {
    }
    return
  }
  func.func @transform_0(%arg0: i32, %arg1: i32, %arg2: i32) -> (i32, i32) {
    %c0_i32 = arith.constant 0 : i32
    return %arg0, %arg2 : i32, i32
  }
  func.func @transform_1(%arg0: i32, %arg1: i32, %arg2: i32) -> (i32, i32) {
    %c0_i32 = arith.constant 0 : i32
    return %arg2, %arg1 : i32, i32
  }
  func.func @transform_2(%arg0: i32, %arg1: i32, %arg2: i32) -> (i32, i32) {
    %c0_i32 = arith.constant 0 : i32
    %c0_i32_0 = arith.constant 0 : i32
    return %c0_i32, %arg1 : i32, i32
  }
  func.func @transform_3(%arg0: i32, %arg1: i32, %arg2: i32) -> (i32, i32) {
    %c0_i32 = arith.constant 0 : i32
    return %arg0, %arg1 : i32, i32
  }
}

module attributes {stable_mosaic.version = 11 : i64} {
  func.func @_add_layernorm_kernel(%arg0: i32, %arg1: i32, %arg2: memref<8x32xf32, #tpu.memory_space<vmem>>, %arg3: memref<1x1x32xf32, #tpu.memory_space<vmem>>, %arg4: memref<1x32xf32, #tpu.memory_space<vmem>>, %arg5: memref<1x32xf32, #tpu.memory_space<vmem>>, %arg6: memref<8x32xf32, #tpu.memory_space<vmem>>, %arg7: memref<8x32xbf16, #tpu.memory_space<vmem>>) attributes {dimension_semantics = [#tpu.dimension_semantics<parallel>, #tpu.dimension_semantics<parallel>], iteration_bounds = array<i64: 2, 1>, scalar_prefetch = 0 : i64, scratch_operands = 0 : i64, tpu.core_type = #tpu.core_type<tc>, window_params = [{transform_indices = @transform_0, window_bounds = array<i64: 8, 32>}, {transform_indices = @transform_1, window_bounds = array<i64: 1, 1, 32>}, {pipeline_mode = #tpu.pipeline_mode<synchronous>, transform_indices = @transform_2, window_bounds = array<i64: 1, 32>}, {pipeline_mode = #tpu.pipeline_mode<synchronous>, transform_indices = @transform_3, window_bounds = array<i64: 1, 32>}, {transform_indices = @transform_4, window_bounds = array<i64: 8, 32>}, {transform_indices = @transform_5, window_bounds = array<i64: 8, 32>}]} {
    %c0 = arith.constant 0 : index
    %c0_0 = arith.constant 0 : index
    %c0_1 = arith.constant 0 : index
    %0 = vector.load %arg3[%c0, %c0_0, %c0_1] : memref<1x1x32xf32, #tpu.memory_space<vmem>>, vector<1x1x32xf32>
    %1 = vector.shape_cast %0 : vector<1x1x32xf32> to vector<1x32xf32>
    %c0_2 = arith.constant 0 : index
    %c0_3 = arith.constant 0 : index
    %2 = vector.load %arg2[%c0_2, %c0_3] : memref<8x32xf32, #tpu.memory_space<vmem>>, vector<8x32xf32>
    %3 = vector.broadcast %1 : vector<1x32xf32> to vector<8x32xf32>
    %4 = arith.addf %2, %3 : vector<8x32xf32>
    %cst = arith.constant dense<0.000000e+00> : vector<8xf32>
    %5 = vector.multi_reduction <add>, %4, %cst [1] : vector<8x32xf32> to vector<8xf32>
    %6 = vector.shape_cast %5 : vector<8xf32> to vector<8x1xf32>
    %cst_4 = arith.constant 3.200000e+01 : f32
    %7 = vector.broadcast %cst_4 : f32 to vector<8x1xf32>
    %8 = arith.divf %6, %7 : vector<8x1xf32>
    %9 = vector.broadcast %8 : vector<8x1xf32> to vector<8x32xf32>
    %10 = arith.subf %4, %9 : vector<8x32xf32>
    %11 = arith.mulf %10, %10 : vector<8x32xf32>
    %cst_5 = arith.constant dense<0.000000e+00> : vector<8xf32>
    %12 = vector.multi_reduction <add>, %11, %cst_5 [1] : vector<8x32xf32> to vector<8xf32>
    %13 = vector.shape_cast %12 : vector<8xf32> to vector<8x1xf32>
    %cst_6 = arith.constant 3.200000e+01 : f32
    %14 = vector.broadcast %cst_6 : f32 to vector<8x1xf32>
    %15 = arith.divf %13, %14 : vector<8x1xf32>
    %cst_7 = arith.constant 9.99999974E-6 : f32
    %16 = vector.broadcast %cst_7 : f32 to vector<8x1xf32>
    %17 = arith.addf %15, %16 : vector<8x1xf32>
    %18 = math.rsqrt %17 : vector<8x1xf32>
    %19 = vector.broadcast %18 : vector<8x1xf32> to vector<8x32xf32>
    %20 = arith.mulf %10, %19 : vector<8x32xf32>
    %c0_8 = arith.constant 0 : index
    %c0_9 = arith.constant 0 : index
    %21 = vector.load %arg4[%c0_8, %c0_9] : memref<1x32xf32, #tpu.memory_space<vmem>>, vector<1x32xf32>
    %22 = vector.broadcast %21 : vector<1x32xf32> to vector<8x32xf32>
    %23 = arith.mulf %20, %22 : vector<8x32xf32>
    %c0_10 = arith.constant 0 : index
    %c0_11 = arith.constant 0 : index
    %24 = vector.load %arg5[%c0_10, %c0_11] : memref<1x32xf32, #tpu.memory_space<vmem>>, vector<1x32xf32>
    %25 = vector.broadcast %24 : vector<1x32xf32> to vector<8x32xf32>
    %26 = arith.addf %23, %25 : vector<8x32xf32>
    %c0_12 = arith.constant 0 : index
    %c0_13 = arith.constant 0 : index
    %27 = vector.load %arg6[%c0_12, %c0_13] : memref<8x32xf32, #tpu.memory_space<vmem>>, vector<8x32xf32>
    tpu.vector_store %arg6[%c0_12, %c0_13], %26 {strides = array<i32>} : memref<8x32xf32, #tpu.memory_space<vmem>>, vector<8x32xf32>,
    %28 = arith.truncf %26 : vector<8x32xf32> to vector<8x32xbf16>
    %c0_14 = arith.constant 0 : index
    %c0_15 = arith.constant 0 : index
    %29 = vector.load %arg7[%c0_14, %c0_15] : memref<8x32xbf16, #tpu.memory_space<vmem>>, vector<8x32xbf16>
    tpu.vector_store %arg7[%c0_14, %c0_15], %28 {strides = array<i32>} : memref<8x32xbf16, #tpu.memory_space<vmem>>, vector<8x32xbf16>,
    return
  }
  func.func @transform_0(%arg0: i32, %arg1: i32) -> (i32, i32) {
    %c1_i32 = arith.constant 1 : i32
    %0 = arith.muli %arg0, %c1_i32 : i32
    %1 = arith.addi %0, %arg1 : i32
    %c0_i32 = arith.constant 0 : i32
    %c0_i32_0 = arith.constant 0 : i32
    return %1, %c0_i32 : i32, i32
  }
  func.func @transform_1(%arg0: i32, %arg1: i32) -> (i32, i32, i32) {
    %c0_i32 = arith.constant 0 : i32
    %c0_i32_0 = arith.constant 0 : i32
    %c0_i32_1 = arith.constant 0 : i32
    return %arg0, %c0_i32, %c0_i32_0 : i32, i32, i32
  }
  func.func @transform_2(%arg0: i32, %arg1: i32) -> (i32, i32) {
    %c0_i32 = arith.constant 0 : i32
    %c0_i32_0 = arith.constant 0 : i32
    %c0_i32_1 = arith.constant 0 : i32
    return %c0_i32, %c0_i32_0 : i32, i32
  }
  func.func @transform_3(%arg0: i32, %arg1: i32) -> (i32, i32) {
    %c0_i32 = arith.constant 0 : i32
    %c0_i32_0 = arith.constant 0 : i32
    %c0_i32_1 = arith.constant 0 : i32
    return %c0_i32, %c0_i32_0 : i32, i32
  }
  func.func @transform_4(%arg0: i32, %arg1: i32) -> (i32, i32) {
    %c1_i32 = arith.constant 1 : i32
    %0 = arith.muli %arg0, %c1_i32 : i32
    %1 = arith.addi %0, %arg1 : i32
    %c0_i32 = arith.constant 0 : i32
    %c0_i32_0 = arith.constant 0 : i32
    return %1, %c0_i32 : i32, i32
  }
  func.func @transform_5(%arg0: i32, %arg1: i32) -> (i32, i32) {
    %c1_i32 = arith.constant 1 : i32
    %0 = arith.muli %arg0, %c1_i32 : i32
    %1 = arith.addi %0, %arg1 : i32
    %c0_i32 = arith.constant 0 : i32
    %c0_i32_0 = arith.constant 0 : i32
    return %1, %c0_i32 : i32, i32
  }
}

module attributes {stable_mosaic.version = 11 : i64} {
  func.func @_matmul_bias_kernel(%arg0: i32, %arg1: i32, %arg2: i32, %arg3: memref<16x32xbf16, #tpu.memory_space<vmem>>, %arg4: memref<32x64xbf16, #tpu.memory_space<vmem>>, %arg5: memref<1x64xf32, #tpu.memory_space<vmem>>, %arg6: memref<16x64xbf16, #tpu.memory_space<vmem>>, %arg7: memref<16x64xf32, #tpu.memory_space<vmem>>) attributes {dimension_semantics = [#tpu.dimension_semantics<parallel>, #tpu.dimension_semantics<parallel>, #tpu.dimension_semantics<arbitrary>], iteration_bounds = array<i64: 1, 1, 1>, scalar_prefetch = 0 : i64, scratch_operands = 1 : i64, tpu.core_type = #tpu.core_type<tc>, window_params = [{transform_indices = @transform_0, window_bounds = array<i64: 16, 32>}, {transform_indices = @transform_1, window_bounds = array<i64: 32, 64>}, {transform_indices = @transform_2, window_bounds = array<i64: 1, 64>}, {transform_indices = @transform_3, window_bounds = array<i64: 16, 64>}]} {
    %c0_i32 = arith.constant 0 : i32
    %0 = arith.cmpi eq, %arg2, %c0_i32 : i32
    %1 = arith.extui %0 : i1 to i32
    %c0_i32_0 = arith.constant 0 : i32
    %2 = arith.cmpi ne, %1, %c0_i32_0 : i32
    scf.if %2 {
      %cst_10 = arith.constant 0.000000e+00 : f32
      %12 = vector.broadcast %cst_10 : f32 to vector<16x64xf32>
      %c0_11 = arith.constant 0 : index
      %c0_12 = arith.constant 0 : index
      %13 = vector.load %arg7[%c0_11, %c0_12] : memref<16x64xf32, #tpu.memory_space<vmem>>, vector<16x64xf32>
      tpu.vector_store %arg7[%c0_11, %c0_12], %12 {strides = array<i32>} : memref<16x64xf32, #tpu.memory_space<vmem>>, vector<16x64xf32>,
    } else {
    }
    %c0 = arith.constant 0 : index
    %c0_1 = arith.constant 0 : index
    %3 = vector.load %arg7[%c0, %c0_1] : memref<16x64xf32, #tpu.memory_space<vmem>>, vector<16x64xf32>
    %c0_2 = arith.constant 0 : index
    %c0_3 = arith.constant 0 : index
    %4 = vector.load %arg3[%c0_2, %c0_3] : memref<16x32xbf16, #tpu.memory_space<vmem>>, vector<16x32xbf16>
    %c0_4 = arith.constant 0 : index
    %c0_5 = arith.constant 0 : index
    %5 = vector.load %arg4[%c0_4, %c0_5] : memref<32x64xbf16, #tpu.memory_space<vmem>>, vector<32x64xbf16>
    %cst = arith.constant dense<0.000000e+00> : vector<16x64xf32>
    %6 = tpu.matmul %4, %5, %cst {dimension_numbers = #tpu.dot_dimension_numbers<[1], [0], [0], [1], [0, 0, 1, 1], [], []>} : vector<16x32xbf16>, vector<32x64xbf16>, vector<16x64xf32> -> vector<16x64xf32>
    %7 = arith.addf %3, %6 : vector<16x64xf32>
    %c0_6 = arith.constant 0 : index
    %c0_7 = arith.constant 0 : index
    %8 = vector.load %arg7[%c0_6, %c0_7] : memref<16x64xf32, #tpu.memory_space<vmem>>, vector<16x64xf32>
    tpu.vector_store %arg7[%c0_6, %c0_7], %7 {strides = array<i32>} : memref<16x64xf32, #tpu.memory_space<vmem>>, vector<16x64xf32>,
    %c0_i32_8 = arith.constant 0 : i32
    %9 = arith.cmpi eq, %arg2, %c0_i32_8 : i32
    %10 = arith.extui %9 : i1 to i32
    %c0_i32_9 = arith.constant 0 : i32
    %11 = arith.cmpi ne, %10, %c0_i32_9 : i32
    scf.if %11 {
      %c0_10 = arith.constant 0 : index
      %c0_11 = arith.constant 0 : index
      %12 = vector.load %arg7[%c0_10, %c0_11] : memref<16x64xf32, #tpu.memory_space<vmem>>, vector<16x64xf32>
      %c0_12 = arith.constant 0 : index
      %c0_13 = arith.constant 0 : index
      %13 = vector.load %arg5[%c0_12, %c0_13] : memref<1x64xf32, #tpu.memory_space<vmem>>, vector<1x64xf32>
      %14 = vector.broadcast %13 : vector<1x64xf32> to vector<16x64xf32>
      %15 = arith.addf %12, %14 : vector<16x64xf32>
      %cst_14 = arith.constant 5.000000e-01 : f32
      %16 = vector.broadcast %cst_14 : f32 to vector<16x64xf32>
      %17 = arith.mulf %16, %15 : vector<16x64xf32>
      %cst_15 = arith.constant 4.471500e-02 : f32
      %18 = vector.broadcast %cst_15 : f32 to vector<16x64xf32>
      %19 = arith.mulf %18, %15 : vector<16x64xf32>
      %20 = arith.mulf %19, %15 : vector<16x64xf32>
      %21 = arith.mulf %20, %15 : vector<16x64xf32>
      %22 = arith.addf %15, %21 : vector<16x64xf32>
      %cst_16 = arith.constant 0.797884583 : f32
      %23 = vector.broadcast %cst_16 : f32 to vector<16x64xf32>
      %24 = arith.mulf %23, %22 : vector<16x64xf32>
      %25 = math.tanh %24 : vector<16x64xf32>
      %cst_17 = arith.constant 1.000000e+00 : f32
      %26 = vector.broadcast %cst_17 : f32 to vector<16x64xf32>
      %27 = arith.addf %26, %25 : vector<16x64xf32>
      %28 = arith.mulf %17, %27 : vector<16x64xf32>
      %29 = arith.truncf %28 : vector<16x64xf32> to vector<16x64xbf16>
      %c0_18 = arith.constant 0 : index
      %c0_19 = arith.constant 0 : index
      %30 = vector.load %arg6[%c0_18, %c0_19] : memref<16x64xbf16, #tpu.memory_space<vmem>>, vector<16x64xbf16>
      tpu.vector_store %arg6[%c0_18, %c0_19], %29 {strides = array<i32>} : memref<16x64xbf16, #tpu.memory_space<vmem>>, vector<16x64xbf16>,
    } else {
    }
    return
  }
  func.func @transform_0(%arg0: i32, %arg1: i32, %arg2: i32) -> (i32, i32) {
    %c0_i32 = arith.constant 0 : i32
    return %arg0, %arg2 : i32, i32
  }
  func.func @transform_1(%arg0: i32, %arg1: i32, %arg2: i32) -> (i32, i32) {
    %c0_i32 = arith.constant 0 : i32
    return %arg2, %arg1 : i32, i32
  }
  func.func @transform_2(%arg0: i32, %arg1: i32, %arg2: i32) -> (i32, i32) {
    %c0_i32 = arith.constant 0 : i32
    %c0_i32_0 = arith.constant 0 : i32
    return %c0_i32, %arg1 : i32, i32
  }
  func.func @transform_3(%arg0: i32, %arg1: i32, %arg2: i32) -> (i32, i32) {
    %c0_i32 = arith.constant 0 : i32
    return %arg0, %arg1 : i32, i32
  }
}

module attributes {stable_mosaic.version = 11 : i64} {
  func.func @_matmul_bias_kernel(%arg0: i32, %arg1: i32, %arg2: i32, %arg3: memref<16x64xbf16, #tpu.memory_space<vmem>>, %arg4: memref<64x32xbf16, #tpu.memory_space<vmem>>, %arg5: memref<1x32xf32, #tpu.memory_space<vmem>>, %arg6: memref<16x32xbf16, #tpu.memory_space<vmem>>, %arg7: memref<16x32xf32, #tpu.memory_space<vmem>>) attributes {dimension_semantics = [#tpu.dimension_semantics<parallel>, #tpu.dimension_semantics<parallel>, #tpu.dimension_semantics<arbitrary>], iteration_bounds = array<i64: 1, 1, 1>, scalar_prefetch = 0 : i64, scratch_operands = 1 : i64, tpu.core_type = #tpu.core_type<tc>, window_params = [{transform_indices = @transform_0, window_bounds = array<i64: 16, 64>}, {transform_indices = @transform_1, window_bounds = array<i64: 64, 32>}, {transform_indices = @transform_2, window_bounds = array<i64: 1, 32>}, {transform_indices = @transform_3, window_bounds = array<i64: 16, 32>}]} {
    %c0_i32 = arith.constant 0 : i32
    %0 = arith.cmpi eq, %arg2, %c0_i32 : i32
    %1 = arith.extui %0 : i1 to i32
    %c0_i32_0 = arith.constant 0 : i32
    %2 = arith.cmpi ne, %1, %c0_i32_0 : i32
    scf.if %2 {
      %cst_10 = arith.constant 0.000000e+00 : f32
      %12 = vector.broadcast %cst_10 : f32 to vector<16x32xf32>
      %c0_11 = arith.constant 0 : index
      %c0_12 = arith.constant 0 : index
      %13 = vector.load %arg7[%c0_11, %c0_12] : memref<16x32xf32, #tpu.memory_space<vmem>>, vector<16x32xf32>
      tpu.vector_store %arg7[%c0_11, %c0_12], %12 {strides = array<i32>} : memref<16x32xf32, #tpu.memory_space<vmem>>, vector<16x32xf32>,
    } else {
    }
    %c0 = arith.constant 0 : index
    %c0_1 = arith.constant 0 : index
    %3 = vector.load %arg7[%c0, %c0_1] : memref<16x32xf32, #tpu.memory_space<vmem>>, vector<16x32xf32>
    %c0_2 = arith.constant 0 : index
    %c0_3 = arith.constant 0 : index
    %4 = vector.load %arg3[%c0_2, %c0_3] : memref<16x64xbf16, #tpu.memory_space<vmem>>, vector<16x64xbf16>
    %c0_4 = arith.constant 0 : index
    %c0_5 = arith.constant 0 : index
    %5 = vector.load %arg4[%c0_4, %c0_5] : memref<64x32xbf16, #tpu.memory_space<vmem>>, vector<64x32xbf16>
    %cst = arith.constant dense<0.000000e+00> : vector<16x32xf32>
    %6 = tpu.matmul %4, %5, %cst {dimension_numbers = #tpu.dot_dimension_numbers<[1], [0], [0], [1], [0, 0, 1, 1], [], []>} : vector<16x64xbf16>, vector<64x32xbf16>, vector<16x32xf32> -> vector<16x32xf32>
    %7 = arith.addf %3, %6 : vector<16x32xf32>
    %c0_6 = arith.constant 0 : index
    %c0_7 = arith.constant 0 : index
    %8 = vector.load %arg7[%c0_6, %c0_7] : memref<16x32xf32, #tpu.memory_space<vmem>>, vector<16x32xf32>
    tpu.vector_store %arg7[%c0_6, %c0_7], %7 {strides = array<i32>} : memref<16x32xf32, #tpu.memory_space<vmem>>, vector<16x32xf32>,
    %c0_i32_8 = arith.constant 0 : i32
    %9 = arith.cmpi eq, %arg2, %c0_i32_8 : i32
    %10 = arith.extui %9 : i1 to i32
    %c0_i32_9 = arith.constant 0 : i32
    %11 = arith.cmpi ne, %10, %c0_i32_9 : i32
    scf.if %11 {
      %c0_10 = arith.constant 0 : index
      %c0_11 = arith.constant 0 : index
      %12 = vector.load %arg7[%c0_10, %c0_11] : memref<16x32xf32, #tpu.memory_space<vmem>>, vector<16x32xf32>
      %c0_12 = arith.constant 0 : index
      %c0_13 = arith.constant 0 : index
      %13 = vector.load %arg5[%c0_12, %c0_13] : memref<1x32xf32, #tpu.memory_space<vmem>>, vector<1x32xf32>
      %14 = vector.broadcast %13 : vector<1x32xf32> to vector<16x32xf32>
      %15 = arith.addf %12, %14 : vector<16x32xf32>
      %16 = arith.truncf %15 : vector<16x32xf32> to vector<16x32xbf16>
      %c0_14 = arith.constant 0 : index
      %c0_15 = arith.constant 0 : index
      %17 = vector.load %arg6[%c0_14, %c0_15] : memref<16x32xbf16, #tpu.memory_space<vmem>>, vector<16x32xbf16>
      tpu.vector_store %arg6[%c0_14, %c0_15], %16 {strides = array<i32>} : memref<16x32xbf16, #tpu.memory_space<vmem>>, vector<16x32xbf16>,
    } else {
    }
    return
  }
  func.func @transform_0(%arg0: i32, %arg1: i32, %arg2: i32) -> (i32, i32) {
    %c0_i32 = arith.constant 0 : i32
    return %arg0, %arg2 : i32, i32
  }
  func.func @transform_1(%arg0: i32, %arg1: i32, %arg2: i32) -> (i32, i32) {
    %c0_i32 = arith.constant 0 : i32
    return %arg2, %arg1 : i32, i32
  }
  func.func @transform_2(%arg0: i32, %arg1: i32, %arg2: i32) -> (i32, i32) {
    %c0_i32 = arith.constant 0 : i32
    %c0_i32_0 = arith.constant 0 : i32
    return %c0_i32, %arg1 : i32, i32
  }
  func.func @transform_3(%arg0: i32, %arg1: i32, %arg2: i32) -> (i32, i32) {
    %c0_i32 = arith.constant 0 : i32
    return %arg0, %arg1 : i32, i32
  }
}

module attributes {stable_mosaic.version = 11 : i64} {
  func.func @_add_layernorm_kernel(%arg0: i32, %arg1: i32, %arg2: memref<8x32xf32, #tpu.memory_space<vmem>>, %arg3: memref<8x32xbf16, #tpu.memory_space<vmem>>, %arg4: memref<1x32xf32, #tpu.memory_space<vmem>>, %arg5: memref<1x32xf32, #tpu.memory_space<vmem>>, %arg6: memref<8x32xf32, #tpu.memory_space<vmem>>, %arg7: memref<8x32xbf16, #tpu.memory_space<vmem>>) attributes {dimension_semantics = [#tpu.dimension_semantics<parallel>, #tpu.dimension_semantics<parallel>], iteration_bounds = array<i64: 2, 1>, scalar_prefetch = 0 : i64, scratch_operands = 0 : i64, tpu.core_type = #tpu.core_type<tc>, window_params = [{transform_indices = @transform_0, window_bounds = array<i64: 8, 32>}, {transform_indices = @transform_1, window_bounds = array<i64: 8, 32>}, {pipeline_mode = #tpu.pipeline_mode<synchronous>, transform_indices = @transform_2, window_bounds = array<i64: 1, 32>}, {pipeline_mode = #tpu.pipeline_mode<synchronous>, transform_indices = @transform_3, window_bounds = array<i64: 1, 32>}, {transform_indices = @transform_4, window_bounds = array<i64: 8, 32>}, {transform_indices = @transform_5, window_bounds = array<i64: 8, 32>}]} {
    %c0 = arith.constant 0 : index
    %c0_0 = arith.constant 0 : index
    %0 = vector.load %arg3[%c0, %c0_0] : memref<8x32xbf16, #tpu.memory_space<vmem>>, vector<8x32xbf16>
    %c0_1 = arith.constant 0 : index
    %c0_2 = arith.constant 0 : index
    %1 = vector.load %arg2[%c0_1, %c0_2] : memref<8x32xf32, #tpu.memory_space<vmem>>, vector<8x32xf32>
    %2 = arith.extf %0 : vector<8x32xbf16> to vector<8x32xf32>
    %3 = arith.addf %1, %2 : vector<8x32xf32>
    %cst = arith.constant dense<0.000000e+00> : vector<8xf32>
    %4 = vector.multi_reduction <add>, %3, %cst [1] : vector<8x32xf32> to vector<8xf32>
    %5 = vector.shape_cast %4 : vector<8xf32> to vector<8x1xf32>
    %cst_3 = arith.constant 3.200000e+01 : f32
    %6 = vector.broadcast %cst_3 : f32 to vector<8x1xf32>
    %7 = arith.divf %5, %6 : vector<8x1xf32>
    %8 = vector.broadcast %7 : vector<8x1xf32> to vector<8x32xf32>
    %9 = arith.subf %3, %8 : vector<8x32xf32>
    %10 = arith.mulf %9, %9 : vector<8x32xf32>
    %cst_4 = arith.constant dense<0.000000e+00> : vector<8xf32>
    %11 = vector.multi_reduction <add>, %10, %cst_4 [1] : vector<8x32xf32> to vector<8xf32>
    %12 = vector.shape_cast %11 : vector<8xf32> to vector<8x1xf32>
    %cst_5 = arith.constant 3.200000e+01 : f32
    %13 = vector.broadcast %cst_5 : f32 to vector<8x1xf32>
    %14 = arith.divf %12, %13 : vector<8x1xf32>
    %cst_6 = arith.constant 9.99999974E-6 : f32
    %15 = vector.broadcast %cst_6 : f32 to vector<8x1xf32>
    %16 = arith.addf %14, %15 : vector<8x1xf32>
    %17 = math.rsqrt %16 : vector<8x1xf32>
    %18 = vector.broadcast %17 : vector<8x1xf32> to vector<8x32xf32>
    %19 = arith.mulf %9, %18 : vector<8x32xf32>
    %c0_7 = arith.constant 0 : index
    %c0_8 = arith.constant 0 : index
    %20 = vector.load %arg4[%c0_7, %c0_8] : memref<1x32xf32, #tpu.memory_space<vmem>>, vector<1x32xf32>
    %21 = vector.broadcast %20 : vector<1x32xf32> to vector<8x32xf32>
    %22 = arith.mulf %19, %21 : vector<8x32xf32>
    %c0_9 = arith.constant 0 : index
    %c0_10 = arith.constant 0 : index
    %23 = vector.load %arg5[%c0_9, %c0_10] : memref<1x32xf32, #tpu.memory_space<vmem>>, vector<1x32xf32>
    %24 = vector.broadcast %23 : vector<1x32xf32> to vector<8x32xf32>
    %25 = arith.addf %22, %24 : vector<8x32xf32>
    %c0_11 = arith.constant 0 : index
    %c0_12 = arith.constant 0 : index
    %26 = vector.load %arg6[%c0_11, %c0_12] : memref<8x32xf32, #tpu.memory_space<vmem>>, vector<8x32xf32>
    tpu.vector_store %arg6[%c0_11, %c0_12], %25 {strides = array<i32>} : memref<8x32xf32, #tpu.memory_space<vmem>>, vector<8x32xf32>,
    %27 = arith.truncf %25 : vector<8x32xf32> to vector<8x32xbf16>
    %c0_13 = arith.constant 0 : index
    %c0_14 = arith.constant 0 : index
    %28 = vector.load %arg7[%c0_13, %c0_14] : memref<8x32xbf16, #tpu.memory_space<vmem>>, vector<8x32xbf16>
    tpu.vector_store %arg7[%c0_13, %c0_14], %27 {strides = array<i32>} : memref<8x32xbf16, #tpu.memory_space<vmem>>, vector<8x32xbf16>,
    return
  }
  func.func @transform_0(%arg0: i32, %arg1: i32) -> (i32, i32) {
    %c1_i32 = arith.constant 1 : i32
    %0 = arith.muli %arg0, %c1_i32 : i32
    %1 = arith.addi %0, %arg1 : i32
    %c0_i32 = arith.constant 0 : i32
    %c0_i32_0 = arith.constant 0 : i32
    return %1, %c0_i32 : i32, i32
  }
  func.func @transform_1(%arg0: i32, %arg1: i32) -> (i32, i32) {
    %c1_i32 = arith.constant 1 : i32
    %0 = arith.muli %arg0, %c1_i32 : i32
    %1 = arith.addi %0, %arg1 : i32
    %c0_i32 = arith.constant 0 : i32
    %c0_i32_0 = arith.constant 0 : i32
    return %1, %c0_i32 : i32, i32
  }
  func.func @transform_2(%arg0: i32, %arg1: i32) -> (i32, i32) {
    %c0_i32 = arith.constant 0 : i32
    %c0_i32_0 = arith.constant 0 : i32
    %c0_i32_1 = arith.constant 0 : i32
    return %c0_i32, %c0_i32_0 : i32, i32
  }
  func.func @transform_3(%arg0: i32, %arg1: i32) -> (i32, i32) {
    %c0_i32 = arith.constant 0 : i32
    %c0_i32_0 = arith.constant 0 : i32
    %c0_i32_1 = arith.constant 0 : i32
    return %c0_i32, %c0_i32_0 : i32, i32
  }
  func.func @transform_4(%arg0: i32, %arg1: i32) -> (i32, i32) {
    %c1_i32 = arith.constant 1 : i32
    %0 = arith.muli %arg0, %c1_i32 : i32
    %1 = arith.addi %0, %arg1 : i32
    %c0_i32 = arith.constant 0 : i32
    %c0_i32_0 = arith.constant 0 : i32
    return %1, %c0_i32 : i32, i32
  }
  func.func @transform_5(%arg0: i32, %arg1: i32) -> (i32, i32) {
    %c1_i32 = arith.constant 1 : i32
    %0 = arith.muli %arg0, %c1_i32 : i32
    %1 = arith.addi %0, %arg1 : i32
    %c0_i32 = arith.constant 0 : i32
    %c0_i32_0 = arith.constant 0 : i32
    return %1, %c0_i32 : i32, i32
  }
}

module attributes {stable_mosaic.version = 11 : i64} {
  func.func @_add_layernorm_kernel(%arg0: i32, %arg1: i32, %arg2: memref<8x32xf32, #tpu.memory_space<vmem>>, %arg3: memref<8x32xbf16, #tpu.memory_space<vmem>>, %arg4: memref<1x32xf32, #tpu.memory_space<vmem>>, %arg5: memref<1x32xf32, #tpu.memory_space<vmem>>, %arg6: memref<8x32xf32, #tpu.memory_space<vmem>>, %arg7: memref<8x32xbf16, #tpu.memory_space<vmem>>) attributes {dimension_semantics = [#tpu.dimension_semantics<parallel>, #tpu.dimension_semantics<parallel>], iteration_bounds = array<i64: 2, 1>, scalar_prefetch = 0 : i64, scratch_operands = 0 : i64, tpu.core_type = #tpu.core_type<tc>, window_params = [{transform_indices = @transform_0, window_bounds = array<i64: 8, 32>}, {transform_indices = @transform_1, window_bounds = array<i64: 8, 32>}, {pipeline_mode = #tpu.pipeline_mode<synchronous>, transform_indices = @transform_2, window_bounds = array<i64: 1, 32>}, {pipeline_mode = #tpu.pipeline_mode<synchronous>, transform_indices = @transform_3, window_bounds = array<i64: 1, 32>}, {transform_indices = @transform_4, window_bounds = array<i64: 8, 32>}, {transform_indices = @transform_5, window_bounds = array<i64: 8, 32>}]} {
    %c0 = arith.constant 0 : index
    %c0_0 = arith.constant 0 : index
    %0 = vector.load %arg3[%c0, %c0_0] : memref<8x32xbf16, #tpu.memory_space<vmem>>, vector<8x32xbf16>
    %c0_1 = arith.constant 0 : index
    %c0_2 = arith.constant 0 : index
    %1 = vector.load %arg2[%c0_1, %c0_2] : memref<8x32xf32, #tpu.memory_space<vmem>>, vector<8x32xf32>
    %2 = arith.extf %0 : vector<8x32xbf16> to vector<8x32xf32>
    %3 = arith.addf %1, %2 : vector<8x32xf32>
    %cst = arith.constant dense<0.000000e+00> : vector<8xf32>
    %4 = vector.multi_reduction <add>, %3, %cst [1] : vector<8x32xf32> to vector<8xf32>
    %5 = vector.shape_cast %4 : vector<8xf32> to vector<8x1xf32>
    %cst_3 = arith.constant 3.200000e+01 : f32
    %6 = vector.broadcast %cst_3 : f32 to vector<8x1xf32>
    %7 = arith.divf %5, %6 : vector<8x1xf32>
    %8 = vector.broadcast %7 : vector<8x1xf32> to vector<8x32xf32>
    %9 = arith.subf %3, %8 : vector<8x32xf32>
    %10 = arith.mulf %9, %9 : vector<8x32xf32>
    %cst_4 = arith.constant dense<0.000000e+00> : vector<8xf32>
    %11 = vector.multi_reduction <add>, %10, %cst_4 [1] : vector<8x32xf32> to vector<8xf32>
    %12 = vector.shape_cast %11 : vector<8xf32> to vector<8x1xf32>
    %cst_5 = arith.constant 3.200000e+01 : f32
    %13 = vector.broadcast %cst_5 : f32 to vector<8x1xf32>
    %14 = arith.divf %12, %13 : vector<8x1xf32>
    %cst_6 = arith.constant 9.99999974E-6 : f32
    %15 = vector.broadcast %cst_6 : f32 to vector<8x1xf32>
    %16 = arith.addf %14, %15 : vector<8x1xf32>
    %17 = math.rsqrt %16 : vector<8x1xf32>
    %18 = vector.broadcast %17 : vector<8x1xf32> to vector<8x32xf32>
    %19 = arith.mulf %9, %18 : vector<8x32xf32>
    %c0_7 = arith.constant 0 : index
    %c0_8 = arith.constant 0 : index
    %20 = vector.load %arg4[%c0_7, %c0_8] : memref<1x32xf32, #tpu.memory_space<vmem>>, vector<1x32xf32>
    %21 = vector.broadcast %20 : vector<1x32xf32> to vector<8x32xf32>
    %22 = arith.mulf %19, %21 : vector<8x32xf32>
    %c0_9 = arith.constant 0 : index
    %c0_10 = arith.constant 0 : index
    %23 = vector.load %arg5[%c0_9, %c0_10] : memref<1x32xf32, #tpu.memory_space<vmem>>, vector<1x32xf32>
    %24 = vector.broadcast %23 : vector<1x32xf32> to vector<8x32xf32>
    %25 = arith.addf %22, %24 : vector<8x32xf32>
    %c0_11 = arith.constant 0 : index
    %c0_12 = arith.constant 0 : index
    %26 = vector.load %arg6[%c0_11, %c0_12] : memref<8x32xf32, #tpu.memory_space<vmem>>, vector<8x32xf32>
    tpu.vector_store %arg6[%c0_11, %c0_12], %25 {strides = array<i32>} : memref<8x32xf32, #tpu.memory_space<vmem>>, vector<8x32xf32>,
    %27 = arith.truncf %25 : vector<8x32xf32> to vector<8x32xbf16>
    %c0_13 = arith.constant 0 : index
    %c0_14 = arith.constant 0 : index
    %28 = vector.load %arg7[%c0_13, %c0_14] : memref<8x32xbf16, #tpu.memory_space<vmem>>, vector<8x32xbf16>
    tpu.vector_store %arg7[%c0_13, %c0_14], %27 {strides = array<i32>} : memref<8x32xbf16, #tpu.memory_space<vmem>>, vector<8x32xbf16>,
    return
  }
  func.func @transform_0(%arg0: i32, %arg1: i32) -> (i32, i32) {
    %c1_i32 = arith.constant 1 : i32
    %0 = arith.muli %arg0, %c1_i32 : i32
    %1 = arith.addi %0, %arg1 : i32
    %c0_i32 = arith.constant 0 : i32
    %c0_i32_0 = arith.constant 0 : i32
    return %1, %c0_i32 : i32, i32
  }
  func.func @transform_1(%arg0: i32, %arg1: i32) -> (i32, i32) {
    %c1_i32 = arith.constant 1 : i32
    %0 = arith.muli %arg0, %c1_i32 : i32
    %1 = arith.addi %0, %arg1 : i32
    %c0_i32 = arith.constant 0 : i32
    %c0_i32_0 = arith.constant 0 : i32
    return %1, %c0_i32 : i32, i32
  }
  func.func @transform_2(%arg0: i32, %arg1: i32) -> (i32, i32) {
    %c0_i32 = arith.constant 0 : i32
    %c0_i32_0 = arith.constant 0 : i32
    %c0_i32_1 = arith.constant 0 : i32
    return %c0_i32, %c0_i32_0 : i32, i32
  }
  func.func @transform_3(%arg0: i32, %arg1: i32) -> (i32, i32) {
    %c0_i32 = arith.constant 0 : i32
    %c0_i32_0 = arith.constant 0 : i32
    %c0_i32_1 = arith.constant 0 : i32
    return %c0_i32, %c0_i32_0 : i32, i32
  }
  func.func @transform_4(%arg0: i32, %arg1: i32) -> (i32, i32) {
    %c1_i32 = arith.constant 1 : i32
    %0 = arith.muli %arg0, %c1_i32 : i32
    %1 = arith.addi %0, %arg1 : i32
    %c0_i32 = arith.constant 0 : i32
    %c0_i32_0 = arith.constant 0 : i32
    return %1, %c0_i32 : i32, i32
  }
  func.func @transform_5(%arg0: i32, %arg1: i32) -> (i32, i32) {
    %c1_i32 = arith.constant 1 : i32
    %0 = arith.muli %arg0, %c1_i32 : i32
    %1 = arith.addi %0, %arg1 : i32
    %c0_i32 = arith.constant 0 : i32
    %c0_i32_0 = arith.constant 0 : i32
    return %1, %c0_i32 : i32, i32
  }
}

</mosaic_0001>

<llo_original>
// kernel: gpt_forward.16
$region0: #{gpt_forward.16}
  #allocation0 [shape = 'u32[]', space=smem, size = 0x4, offset = 0x4, fixed_abs, tag = 'smem constant byte address 0x4 - core index']
  #allocation1 [shape = 'u32[144,128]{1,0:T(1,128)}', space=vmem, size = 0x12000, scoped, tag = 'internal scratch']
  #allocation2 [shape = 'f32[2,32]{1,0:T(2,128)}', space=vmem, size = 0x400, scoped, tag = 'scratch operand']
  %s0 = inlined_call_operand.vmem [shape: bf16[2,32], index: 0, kind: input, shape index: {}]
  %s1 = inlined_call_operand.vmem [shape: bf16[32,32], index: 1, kind: input, shape index: {}]
  %s2 = inlined_call_operand.vmem [shape: f32[1,32], index: 2, kind: input, shape index: {}]
  %s3 = inlined_call_operand.vmem [shape: f32[2,32], index: 3, kind: output, shape index: {}]
  %s4 = sld [smem:[#allocation0]]
  $region30: #{gpt_forward.16} parent=0
    _
  %s6 = ssub.s32 1, %s4
  %s7 = scalar_select 0, %s6, %s4
  // Predicated region
  $region2: #{gpt_forward.16} parent=0 // pred_check
    _
  $region3: #{gpt_forward.16} parent=0 // pred_check_branch
    %9 = sbr.rel (0) target = $region5
  $region4: #{gpt_forward.16} parent=0 // pred_region
    _
  $region5: #{gpt_forward.16} parent=0 // pred_fallthru
    _
  // Predicated region
  $region6: #{gpt_forward.16} parent=0 // pred_check
    _
  $region7: #{gpt_forward.16} parent=0 // pred_check_branch
    %11 = sbr.rel (0) target = $region9
  $region8: #{gpt_forward.16} parent=0 // pred_region
    _
  $region9: #{gpt_forward.16} parent=0 // pred_fallthru
    _
  // Predicated region
  $region10: #{gpt_forward.16} parent=0 // pred_check
    _
  $region11: #{gpt_forward.16} parent=0 // pred_check_branch
    %13 = sbr.rel (0) target = $region13
  $region12: #{gpt_forward.16} parent=0 // pred_region
    _
  $region13: #{gpt_forward.16} parent=0 // pred_fallthru
    _
  %p15 = scmp.eq.s32.totalorder 0, 0
  // Predicated region
  $region14: #{gpt_forward.16} parent=0 // pred_check
    %p16 = pneg %p15
  $region15: #{gpt_forward.16} parent=0 // pred_check_branch
    %18 = sbr.rel (%p16) target = $region17
  $region16: #{gpt_forward.16} parent=0 // pred_region
    %vm19 = vcmask 254976
    %20 = vst.msk [vmem:[#allocation2] sm:$0x3] %vm19, 0.0
  $region17: #{gpt_forward.16} parent=0 // pred_fallthru
    _
  %v21 = vld [vmem:[#allocation2] sm:$0x3]
  %v22 = vld [vmem:[%s0] sm:$0x1]
  %v23 = vld [vmem:[%s1] sm:$0xf]
  %v24 = vld [vmem:[%s1 + $0x4] sm:$0xf]
  %v25 = vld [vmem:[%s1 + $0x8] sm:$0xf]
  %v26 = vld [vmem:[%s1 + $0xc] sm:$0xf]
  %v31 = vunpack.c.l.b16 %v23
  %v32 = vunpack.c.l.b16 %v24
  %v33 = vunpack.c.l.b16 %v25
  %v34 = vunpack.c.l.b16 %v26
  %v35 = vpack.c.b16 %v32, %v31
  %v36 = vpack.c.b16 %v34, %v33
  %vm39 = vcmask 261120
  %v41 = vsel %vm39, %v22, 0
  %43 = vmatprep.subr.bf16.mxu0 0
  %44 = vmatpush1.bf16.msra.mxu0 %v35
  %45 = vmatprep.subr.bf16.mxu0 0
  %46 = vmatpush1.bf16.msra.mxu0 %v36
  %47 = vmatprep.subr.bf16.mxu0 0
  %48 = vmatpush1.bf16.msra.mxu0 0
  %49 = vmatprep.subr.bf16.mxu0 0
  %50 = vmatpush1.bf16.msra.mxu0 0
  %51 = vmatprep.subr.bf16.mxu0 0
  %52 = vmatpush1.bf16.msra.mxu0 0
  %53 = vmatprep.subr.bf16.mxu0 0
  %54 = vmatpush1.bf16.msra.mxu0 0
  %55 = vmatprep.subr.bf16.mxu0 0
  %56 = vmatpush1.bf16.msra.mxu0 0
  %57 = vmatprep.subr.bf16.mxu0 0
  %58 = vmatpush1.bf16.msra.mxu0 0
  %59 = vmatprep.subr.bf16.mxu0 0
  %60 = vmatpush1.bf16.msra.mxu0 0
  %61 = vmatprep.subr.bf16.mxu0 0
  %62 = vmatpush1.bf16.msra.mxu0 0
  %63 = vmatprep.subr.bf16.mxu0 0
  %64 = vmatpush1.bf16.msra.mxu0 0
  %65 = vmatprep.subr.bf16.mxu0 0
  %66 = vmatpush1.bf16.msra.mxu0 0
  %67 = vmatprep.subr.bf16.mxu0 0
  %68 = vmatpush1.bf16.msra.mxu0 0
  %69 = vmatprep.subr.bf16.mxu0 0
  %70 = vmatpush1.bf16.msra.mxu0 0
  %71 = vmatprep.subr.bf16.mxu0 0
  %72 = vmatpush1.bf16.msra.mxu0 0
  %73 = vmatprep.subr.bf16.mxu0 0
  %74 = vmatpush1.bf16.msra.mxu0 0
  %75 = vmatprep.mubr.bf16.mxu0 0
  %76 = vmatmul.mubr.bf16.gmra.mrb[0].mxu0 %v41
  %v77 = vpop.f32.mrb[0].mxu0
  %v78 = vadd.f32 0.0, %v77
  %v79 = vpop.f32.mrb[0].mxu0
  %v80 = vpop.f32.mrb[0].mxu0
  %v81 = vpop.f32.mrb[0].mxu0
  %82 = vdwg.mxu0
  %v83 = vadd.f32 %v21, %v78
  %vm84 = vcmask 254976
  %85 = vst.msk [vmem:[#allocation2] sm:$0x3] %vm84, %v83
  // Predicated region
  $region18: #{gpt_forward.16} parent=0 // pred_check
    %p86 = pneg %p15
  $region19: #{gpt_forward.16} parent=0 // pred_check_branch
    %88 = sbr.rel (%p86) target = $region21
  $region20: #{gpt_forward.16} parent=0 // pred_region
    %v89 = vld [vmem:[#allocation2] sm:$0x3]
    %v90 = vld [vmem:[%s2] sm:$0x1]
    %v92 = vlaneseq
    %v93 = vshrl.u32 %v92, 7
    %v94 = vsub.s32 0, %v93
    %v95 = vrot.slane %v90, %v94
    %v97 = vadd.f32 %v89, %v95
    %98 = vst.msk [vmem:[%s3] sm:$0x3] %vm84, %v97
  $region21: #{gpt_forward.16} parent=0 // pred_fallthru
    _
  // Predicated region
  $region22: #{gpt_forward.16} parent=0 // pred_check
    _
  $region23: #{gpt_forward.16} parent=0 // pred_check_branch
    %100 = sbr.rel (0) target = $region25
  $region24: #{gpt_forward.16} parent=0 // pred_region
    _
  $region25: #{gpt_forward.16} parent=0 // pred_fallthru
    _
  // Predicated region
  $region26: #{gpt_forward.16} parent=0 // pred_check
    _
  $region27: #{gpt_forward.16} parent=0 // pred_check_branch
    %102 = sbr.rel (0) target = $region29
  $region28: #{gpt_forward.16} parent=0 // pred_region
    _
  $region29: #{gpt_forward.16} parent=0 // pred_fallthru
    _

// kernel: gpt_forward.14
$region0: #{gpt_forward.14}
  #allocation0 [shape = 'u32[]', space=smem, size = 0x4, offset = 0x4, fixed_abs, tag = 'smem constant byte address 0x4 - core index']
  #allocation1 [shape = 'u32[144,128]{1,0:T(1,128)}', space=vmem, size = 0x12000, scoped, tag = 'internal scratch']
  #allocation2 [shape = 'f32[16,32]{1,0:T(8,128)}', space=vmem, size = 0x2000, scoped, tag = 'scratch operand']
  %s0 = inlined_call_operand.vmem [shape: bf16[16,32], index: 0, kind: input, shape index: {}]
  %s1 = inlined_call_operand.vmem [shape: bf16[32,32], index: 1, kind: input, shape index: {}]
  %s2 = inlined_call_operand.vmem [shape: f32[1,32], index: 2, kind: input, shape index: {}]
  %s3 = inlined_call_operand.vmem [shape: bf16[16,32], index: 3, kind: output, shape index: {}]
  %s4 = sld [smem:[#allocation0]]
  $region30: #{gpt_forward.14} parent=0
    _
  %s6 = ssub.s32 1, %s4
  %s7 = scalar_select 0, %s6, %s4
  // Predicated region
  $region2: #{gpt_forward.14} parent=0 // pred_check
    _
  $region3: #{gpt_forward.14} parent=0 // pred_check_branch
    %9 = sbr.rel (0) target = $region5
  $region4: #{gpt_forward.14} parent=0 // pred_region
    _
  $region5: #{gpt_forward.14} parent=0 // pred_fallthru
    _
  // Predicated region
  $region6: #{gpt_forward.14} parent=0 // pred_check
    _
  $region7: #{gpt_forward.14} parent=0 // pred_check_branch
    %11 = sbr.rel (0) target = $region9
  $region8: #{gpt_forward.14} parent=0 // pred_region
    _
  $region9: #{gpt_forward.14} parent=0 // pred_fallthru
    _
  // Predicated region
  $region10: #{gpt_forward.14} parent=0 // pred_check
    _
  $region11: #{gpt_forward.14} parent=0 // pred_check_branch
    %13 = sbr.rel (0) target = $region13
  $region12: #{gpt_forward.14} parent=0 // pred_region
    _
  $region13: #{gpt_forward.14} parent=0 // pred_fallthru
    _
  %p15 = scmp.eq.s32.totalorder 0, 0
  // Predicated region
  $region14: #{gpt_forward.14} parent=0 // pred_check
    %p16 = pneg %p15
  $region15: #{gpt_forward.14} parent=0 // pred_check_branch
    %18 = sbr.rel (%p16) target = $region17
  $region16: #{gpt_forward.14} parent=0 // pred_region
    %vm19 = vcmask 261120
    %20 = vst.msk [vmem:[#allocation2] sm:$0xff] %vm19, 0.0
    %21 = vst.msk [vmem:[#allocation2 + $0x8] sm:$0xff] %vm19, 0.0
  $region17: #{gpt_forward.14} parent=0 // pred_fallthru
    _
  %v22 = vld [vmem:[#allocation2] sm:$0xff]
  %v23 = vld [vmem:[#allocation2 + $0x8] sm:$0xff]
  %v24 = vld [vmem:[%s0] sm:$0xf]
  %v25 = vld [vmem:[%s0 + $0x4] sm:$0xf]
  %v26 = vld [vmem:[%s1] sm:$0xf]
  %v27 = vld [vmem:[%s1 + $0x4] sm:$0xf]
  %v28 = vld [vmem:[%s1 + $0x8] sm:$0xf]
  %v29 = vld [vmem:[%s1 + $0xc] sm:$0xf]
  %v32 = vunpack.c.l.b16 %v24
  %v33 = vunpack.c.l.b16 %v25
  %v34 = vpack.c.b16 %v33, %v32
  %v39 = vunpack.c.l.b16 %v26
  %v40 = vunpack.c.l.b16 %v27
  %v41 = vunpack.c.l.b16 %v28
  %v42 = vunpack.c.l.b16 %v29
  %v43 = vpack.c.b16 %v40, %v39
  %v44 = vpack.c.b16 %v42, %v41
  %vm47 = vcmask 261120
  %v49 = vsel %vm47, %v34, 0
  %51 = vmatprep.subr.bf16.mxu0 0
  %52 = vmatpush1.bf16.msra.mxu0 %v43
  %53 = vmatprep.subr.bf16.mxu0 0
  %54 = vmatpush1.bf16.msra.mxu0 %v44
  %55 = vmatprep.subr.bf16.mxu0 0
  %56 = vmatpush1.bf16.msra.mxu0 0
  %57 = vmatprep.subr.bf16.mxu0 0
  %58 = vmatpush1.bf16.msra.mxu0 0
  %59 = vmatprep.subr.bf16.mxu0 0
  %60 = vmatpush1.bf16.msra.mxu0 0
  %61 = vmatprep.subr.bf16.mxu0 0
  %62 = vmatpush1.bf16.msra.mxu0 0
  %63 = vmatprep.subr.bf16.mxu0 0
  %64 = vmatpush1.bf16.msra.mxu0 0
  %65 = vmatprep.subr.bf16.mxu0 0
  %66 = vmatpush1.bf16.msra.mxu0 0
  %67 = vmatprep.subr.bf16.mxu0 0
  %68 = vmatpush1.bf16.msra.mxu0 0
  %69 = vmatprep.subr.bf16.mxu0 0
  %70 = vmatpush1.bf16.msra.mxu0 0
  %71 = vmatprep.subr.bf16.mxu0 0
  %72 = vmatpush1.bf16.msra.mxu0 0
  %73 = vmatprep.subr.bf16.mxu0 0
  %74 = vmatpush1.bf16.msra.mxu0 0
  %75 = vmatprep.subr.bf16.mxu0 0
  %76 = vmatpush1.bf16.msra.mxu0 0
  %77 = vmatprep.subr.bf16.mxu0 0
  %78 = vmatpush1.bf16.msra.mxu0 0
  %79 = vmatprep.subr.bf16.mxu0 0
  %80 = vmatpush1.bf16.msra.mxu0 0
  %81 = vmatprep.subr.bf16.mxu0 0
  %82 = vmatpush1.bf16.msra.mxu0 0
  %83 = vmatprep.mubr.bf16.mxu0 0
  %84 = vmatmul.mubr.bf16.gmra.mrb[0].mxu0 %v49
  %v85 = vpop.f32.mrb[0].mxu0
  %v86 = vadd.f32 0.0, %v85
  %v87 = vpop.f32.mrb[0].mxu0
  %v88 = vpop.f32.mrb[0].mxu0
  %v89 = vadd.f32 0.0, %v88
  %v90 = vpop.f32.mrb[0].mxu0
  %91 = vdwg.mxu0
  %v92 = vadd.f32 %v22, %v86
  %v93 = vadd.f32 %v23, %v89
  %94 = vst.msk [vmem:[#allocation2] sm:$0xff] %vm47, %v92
  %95 = vst.msk [vmem:[#allocation2 + $0x8] sm:$0xff] %vm47, %v93
  // Predicated region
  $region18: #{gpt_forward.14} parent=0 // pred_check
    %p96 = pneg %p15
  $region19: #{gpt_forward.14} parent=0 // pred_check_branch
    %98 = sbr.rel (%p96) target = $region21
  $region20: #{gpt_forward.14} parent=0 // pred_region
    %v99 = vld [vmem:[#allocation2] sm:$0xff]
    %v100 = vld [vmem:[#allocation2 + $0x8] sm:$0xff]
    %v101 = vld [vmem:[%s2] sm:$0x1]
    %v103 = vlaneseq
    %v104 = vshrl.u32 %v103, 7
    %v105 = vsub.s32 0, %v104
    %v106 = vrot.slane %v101, %v105
    %v108 = vadd.f32 %v99, %v106
    %v109 = vadd.f32 %v100, %v106
    %v110 = vpack.c.bf16 %v109, %v108
    %v112 = vunpack.c.l.b16 %v110
    %v113 = vunpack.c.h.b16 %v110
    %v114 = vpack.c.b16 %v112, %v112
    %v115 = vpack.c.b16 %v113, %v113
    %vm118 = vcmask 257024
    %119 = vst.msk [vmem:[%s3] sm:$0xf] %vm118, %v114
    %120 = vst.msk [vmem:[%s3 + $0x4] sm:$0xf] %vm118, %v115
  $region21: #{gpt_forward.14} parent=0 // pred_fallthru
    _
  // Predicated region
  $region22: #{gpt_forward.14} parent=0 // pred_check
    _
  $region23: #{gpt_forward.14} parent=0 // pred_check_branch
    %122 = sbr.rel (0) target = $region25
  $region24: #{gpt_forward.14} parent=0 // pred_region
    _
  $region25: #{gpt_forward.14} parent=0 // pred_fallthru
    _
  // Predicated region
  $region26: #{gpt_forward.14} parent=0 // pred_check
    _
  $region27: #{gpt_forward.14} parent=0 // pred_check_branch
    %124 = sbr.rel (0) target = $region29
  $region28: #{gpt_forward.14} parent=0 // pred_region
    _
  $region29: #{gpt_forward.14} parent=0 // pred_fallthru
    _

// kernel: gpt_forward.15
$region0: #{gpt_forward.15}
  #allocation0 [shape = 'u32[]', space=smem, size = 0x4, offset = 0x4, fixed_abs, tag = 'smem constant byte address 0x4 - core index']
  #allocation1 [shape = 'u32[144,128]{1,0:T(1,128)}', space=vmem, size = 0x12000, scoped, tag = 'internal scratch']
  #allocation2 [shape = 'f32[1,32]{1,0:T(1,128)}', space=vmem, size = 0x200, scoped, tag = 'scratch operand']
  %s0 = inlined_call_operand.vmem [shape: bf16[2,8,32], index: 0, kind: input, shape index: {}]
  %s1 = inlined_call_operand.vmem [shape: bf16[2,1,32], index: 1, kind: output, shape index: {}]
  %s2 = sld [smem:[#allocation0]]
  $region45: #{gpt_forward.15} parent=0
    _
  %s4 = ssub.s32 1, %s2
  %s5 = scalar_select 0, %s4, %s2
  loop: start=0, step=1, limit=4
  $region2: #{gpt_forward.15} parent=0 // loop_pre_header
    _
  $region3: #{gpt_forward.15} parent=0 // loop_header
    %s7 = sphi 0, %s11
    %p8 = scmp.ge.s32.totalorder %s7, 4
    %s14 = sphi 0, %s26
    %s15 = sphi 0, %s22
    %s16 = sphi 0, %s14
    %s17 = sphi 0, %s15
    %s18 = sphi 0, %s16
    %s19 = sphi 0, %s17
    %s31 = sphi 0, %s33
    %s34 = sphi 0, %s31
    %s35 = sphi 0, %s34
    %s51 = sphi 0, %s35
    %s57 = sphi 0, %s59
    %s60 = sphi 0, %s57
    %s61 = sphi 0, %s60
    %s77 = sphi 0, %s61
  $region4: #{gpt_forward.15} parent=0 // loop_header_branch
    %10 = sbr.rel (%p8) target = $region8
  $region5: #{gpt_forward.15} parent=0 // loop_body
    %s12 = ssub.s32 %s7, 1
    %s13 = ssub.s32 %s7, 2
    %s20 = sadd.s32 1, %s15
    %p21 = scmp.ge.s32.totalorder %s20, 1
    %s22 = scalar_select %p21, 0, %s20
    %s23 = sadd.s32 1, %s14
    %s24 = scalar_select %p21, %s23, %s14
    %p25 = scmp.ge.s32.totalorder %s24, 2
    %s26 = scalar_select %p25, 0, %s24
    %s27 = ssub.s32 %s14, %s26
    %s28 = ssub.s32 %s15, %s22
    %s29 = sor.u32 %s27, %s28
    %p30 = scmp.eq.s32.totalorder %s29, 0
    %s32 = sadd.s32 %s31, 1
    %s33 = scalar_select %p30, %s31, %s32
    %p36 = pneg %p30
    %p37 = scmp.eq.s32.totalorder %s7, 1
    %p38 = por %p36, %p37
    %p39 = scmp.ne.s32.totalorder %s31, %s34
    %p40 = scmp.eq.s32.totalorder %s7, 0
    %p41 = por %p39, %p40
    %p42 = scmp.ne.s32.totalorder %s31, %s34
    %p43 = scmp.eq.s32.totalorder %s12, 1
    %p44 = por %p42, %p43
    %p45 = scmp.ne.s32.totalorder %s34, %s35
    %p46 = scmp.eq.s32.totalorder %s12, 0
    %p47 = por %p45, %p46
    %p48 = scmp.ne.s32.totalorder %s34, %s35
    %p49 = scmp.eq.s32.totalorder %s13, 1
    %p50 = por %p48, %p49
    %p52 = scmp.ne.s32.totalorder %s35, %s51
    %p53 = scmp.eq.s32.totalorder %s13, 0
    %p54 = por %p52, %p53
    %s55 = ssub.s32 %s14, %s26
    %p56 = scmp.eq.s32.totalorder %s55, 0
    %s58 = sadd.s32 %s57, 1
    %s59 = scalar_select %p56, %s57, %s58
    %p62 = pneg %p56
    %p63 = scmp.eq.s32.totalorder %s7, 1
    %p64 = por %p62, %p63
    %p65 = scmp.ne.s32.totalorder %s57, %s60
    %p66 = scmp.eq.s32.totalorder %s7, 0
    %p67 = por %p65, %p66
    %p68 = scmp.ne.s32.totalorder %s57, %s60
    %p69 = scmp.eq.s32.totalorder %s12, 1
    %p70 = por %p68, %p69
    %p71 = scmp.ne.s32.totalorder %s60, %s61
    %p72 = scmp.eq.s32.totalorder %s12, 0
    %p73 = por %p71, %p72
    %p74 = scmp.ne.s32.totalorder %s60, %s61
    %p75 = scmp.eq.s32.totalorder %s13, 1
    %p76 = por %p74, %p75
    %p78 = scmp.ne.s32.totalorder %s61, %s77
    %p79 = scmp.eq.s32.totalorder %s13, 0
    %p80 = por %p78, %p79
    %p81 = scmp.le.s32.totalorder 1, %s7
    %p82 = scmp.lt.s32.totalorder %s7, 3
    %p83 = pnand %p81, %p82
    %p84 = pneg %p83
    // Predicated region
    $region9: #{gpt_forward.15} parent=5 // pred_check
      _
    $region10: #{gpt_forward.15} parent=5 // pred_check_branch
      %86 = sbr.rel (%p83) target = $region12
    $region11: #{gpt_forward.15} parent=5 // pred_region
      %s87 = ssub.s32 %s7, 1
    $region12: #{gpt_forward.15} parent=5 // pred_fallthru
      _
    %p88 = scmp.lt.s32.totalorder %s7, 2
    // Predicated region
    $region13: #{gpt_forward.15} parent=5 // pred_check
      %p89 = pneg %p88
    $region14: #{gpt_forward.15} parent=5 // pred_check_branch
      %91 = sbr.rel (%p89) target = $region16
    $region15: #{gpt_forward.15} parent=5 // pred_region
      // Predicated region
      $region17: #{gpt_forward.15} parent=15 // pred_check
        %p92 = pneg %p41
      $region18: #{gpt_forward.15} parent=15 // pred_check_branch
        %94 = sbr.rel (%p92) target = $region20
      $region19: #{gpt_forward.15} parent=15 // pred_region
        %p95 = scmp.lt.s32.totalorder %s14, 1
        %s96 = scalar_select %p95, %s14, 1
        %p97 = scmp.lt.s32.totalorder %s15, 0
        %s98 = scalar_select %p97, %s15, 0
        %s99 = sadd.s32 %s98, %s96
        %s100 = smul.addr %s99, 4
        %s101 = scalar_lea.vmem %s0, %s100
      $region20: #{gpt_forward.15} parent=15 // pred_fallthru
        _
    $region16: #{gpt_forward.15} parent=5 // pred_fallthru
      _
    %p102 = scmp.le.s32.totalorder 1, %s7
    %p103 = scmp.lt.s32.totalorder %s7, 3
    %p104 = pnand %p102, %p103
    %p105 = pneg %p104
    // Predicated region
    $region21: #{gpt_forward.15} parent=5 // pred_check
      _
    $region22: #{gpt_forward.15} parent=5 // pred_check_branch
      %107 = sbr.rel (%p104) target = $region24
    $region23: #{gpt_forward.15} parent=5 // pred_region
      %s108 = ssub.s32 %s7, 1
      %p109 = scmp.lt.s32.totalorder %s16, 1
      %s110 = scalar_select %p109, %s16, 1
      %p111 = scmp.lt.s32.totalorder %s17, 0
      %s112 = scalar_select %p111, %s17, 0
      %s113 = sadd.s32 %s112, %s110
      %s114 = smul.addr %s113, 4
      %s115 = scalar_lea.vmem %s0, %s114
      %p116 = pneg %p47
      %p117 = pneg %p44
      %p118 = pneg %p73
      %p119 = pneg %p70
      %p120 = scmp.lt.s32.totalorder %s16, 1
      %s121 = scalar_select %p120, %s16, 1
      %s122 = scalar_lea.vmem %s1, %s121
      %p123 = scmp.lt.s32.totalorder %s16, 1
      %s124 = scalar_select %p123, %s16, 1
      %p125 = scmp.lt.s32.totalorder %s17, 0
      %s126 = scalar_select %p125, %s17, 0
      %s127 = sadd.s32 %s126, %s124
      %s128 = smul.addr %s127, 4
      %s129 = scalar_lea.vmem %s0, %s128
      %p130 = scmp.lt.s32.totalorder %s16, 1
      %s131 = scalar_select %p130, %s16, 1
      %s132 = scalar_lea.vmem %s1, %s131
      %p133 = scmp.eq.s32.totalorder %s17, 0
      // Predicated region
      $region25: #{gpt_forward.15} parent=23 // pred_check
        %p134 = pneg %p133
      $region26: #{gpt_forward.15} parent=23 // pred_check_branch
        %136 = sbr.rel (%p134) target = $region28
      $region27: #{gpt_forward.15} parent=23 // pred_region
        %vm137 = vcmask 253952
        %138 = vst.msk [vmem:[#allocation2] sm:$0x1] %vm137, 0.0
      $region28: #{gpt_forward.15} parent=23 // pred_fallthru
        _
      %v139 = vld [vmem:[#allocation2] sm:$0x1]
      %v140 = vld [vmem:[%s129] sm:$0xf]
      %v141 = vunpack.c.l.bf16 %v140
      %vm142 = vcmask 261120
      %v143 = vsel %vm142, %v141, 0.0
      %v144 = vrot.slane %v143, 4
      %v145 = vadd.f32 %v143, %v144
      %v146 = vrot.slane %v145, 2
      %v147 = vadd.f32 %v145, %v146
      %v148 = vrot.slane %v147, 1
      %v149 = vadd.f32 %v147, %v148
      %v150 = vadd.f32 %v139, %v149
      %vm151 = vcmask 253952
      %152 = vst.msk [vmem:[#allocation2] sm:$0x1] %vm151, %v150
      // Predicated region
      $region29: #{gpt_forward.15} parent=23 // pred_check
        %p153 = pneg %p133
      $region30: #{gpt_forward.15} parent=23 // pred_check_branch
        %155 = sbr.rel (%p153) target = $region32
      $region31: #{gpt_forward.15} parent=23 // pred_region
        %v156 = vld [vmem:[#allocation2] sm:$0x1]
        %v157 = vpack.c.bf16 %v156, %v156
        %vm158 = vcmask 253952
        %vm159 = vsmask.f32 256
        %vm160 = vmand %vm158, %vm159
        %v161 = vld [vmem:[%s132] sm:$0x1]
        %v162 = vsel %vm160, %v157, %v161
        %163 = vst [vmem:[%s132] sm:$0x1] %v162
      $region32: #{gpt_forward.15} parent=23 // pred_fallthru
        _
      %p164 = scmp.lt.s32.totalorder %s16, 1
      %s165 = scalar_select %p164, %s16, 1
      %s166 = scalar_lea.vmem %s1, %s165
      // Predicated region
      $region33: #{gpt_forward.15} parent=23 // pred_check
        %p167 = pneg %p70
      $region34: #{gpt_forward.15} parent=23 // pred_check_branch
        %169 = sbr.rel (%p167) target = $region36
      $region35: #{gpt_forward.15} parent=23 // pred_region
        _
      $region36: #{gpt_forward.15} parent=23 // pred_fallthru
        _
    $region24: #{gpt_forward.15} parent=5 // pred_fallthru
      _
    %p170 = scmp.le.s32.totalorder 2, %s7
    // Predicated region
    $region37: #{gpt_forward.15} parent=5 // pred_check
      %p171 = pneg %p170
    $region38: #{gpt_forward.15} parent=5 // pred_check_branch
      %173 = sbr.rel (%p171) target = $region40
    $region39: #{gpt_forward.15} parent=5 // pred_region
      %s174 = ssub.s32 %s7, 2
      // Predicated region
      $region41: #{gpt_forward.15} parent=39 // pred_check
        %p175 = pneg %p76
      $region42: #{gpt_forward.15} parent=39 // pred_check_branch
        %177 = sbr.rel (%p175) target = $region44
      $region43: #{gpt_forward.15} parent=39 // pred_region
        %p178 = scmp.lt.s32.totalorder %s18, 1
        %s179 = scalar_select %p178, %s18, 1
        %s180 = scalar_lea.vmem %s1, %s179
      $region44: #{gpt_forward.15} parent=39 // pred_fallthru
        _
    $region40: #{gpt_forward.15} parent=5 // pred_fallthru
      _
  $region6: #{gpt_forward.15} parent=0 // loop_footer
    %s11 = sadd.s32 1, %s7
  $region7: #{gpt_forward.15} parent=0 // loop_footer_branch
    %6 = sbr.rel target = $region3
  $region8: #{gpt_forward.15} parent=0 // loop_exit
    _

// kernel: gpt_forward.17
$region0: #{gpt_forward.17}
  #allocation0 [shape = 'u32[]', space=smem, size = 0x4, offset = 0x4, fixed_abs, tag = 'smem constant byte address 0x4 - core index']
  #allocation1 [shape = 'u32[144,128]{1,0:T(1,128)}', space=vmem, size = 0x12000, scoped, tag = 'internal scratch']
  %s0 = inlined_call_operand.vmem [shape: f32[16,32], index: 0, kind: input, shape index: {}]
  %s1 = inlined_call_operand.vmem [shape: f32[2,1,32], index: 1, kind: input, shape index: {}]
  %s2 = inlined_call_operand.vmem [shape: f32[1,32], index: 2, kind: input, shape index: {}]
  %s3 = inlined_call_operand.vmem [shape: f32[1,32], index: 3, kind: input, shape index: {}]
  %s4 = inlined_call_operand.vmem [shape: f32[16,32], index: 4, kind: output, shape index: {0}]
  %s5 = inlined_call_operand.vmem [shape: bf16[16,32], index: 5, kind: output, shape index: {1}]
  %6 = xla_tuple %s4, %s5
  %s7 = sld [smem:[#allocation0]]
  $region57: #{gpt_forward.17} parent=0
    _
  %s9 = ssub.s32 1, %s7
  %s10 = scalar_select 0, %s9, %s7
  loop: start=0, step=1, limit=4
  $region2: #{gpt_forward.17} parent=0 // loop_pre_header
    _
  $region3: #{gpt_forward.17} parent=0 // loop_header
    %s12 = sphi 0, %s16
    %p13 = scmp.ge.s32.totalorder %s12, 4
    %s19 = sphi 0, %s31
    %s20 = sphi 0, %s27
    %s21 = sphi 0, %s19
    %s22 = sphi 0, %s20
    %s23 = sphi 0, %s21
    %s24 = sphi 0, %s22
    %s36 = sphi 0, %s38
    %s39 = sphi 0, %s36
    %s40 = sphi 0, %s39
    %s56 = sphi 0, %s40
    %s62 = sphi 0, %s64
    %s65 = sphi 0, %s62
    %s66 = sphi 0, %s65
    %s82 = sphi 0, %s66
    %s86 = sphi 0, %s86
    %s88 = sphi 0, %s86
    %s89 = sphi 0, %s88
    %s103 = sphi 0, %s89
    %s107 = sphi 0, %s107
    %s109 = sphi 0, %s107
    %s110 = sphi 0, %s109
    %s124 = sphi 0, %s110
    %s132 = sphi 0, %s134
    %s135 = sphi 0, %s132
    %s136 = sphi 0, %s135
    %s152 = sphi 0, %s136
    %s160 = sphi 0, %s162
    %s163 = sphi 0, %s160
    %s164 = sphi 0, %s163
    %s180 = sphi 0, %s164
  $region4: #{gpt_forward.17} parent=0 // loop_header_branch
    %15 = sbr.rel (%p13) target = $region8
  $region5: #{gpt_forward.17} parent=0 // loop_body
    %s17 = ssub.s32 %s12, 1
    %s18 = ssub.s32 %s12, 2
    %s25 = sadd.s32 1, %s20
    %p26 = scmp.ge.s32.totalorder %s25, 1
    %s27 = scalar_select %p26, 0, %s25
    %s28 = sadd.s32 1, %s19
    %s29 = scalar_select %p26, %s28, %s19
    %p30 = scmp.ge.s32.totalorder %s29, 2
    %s31 = scalar_select %p30, 0, %s29
    %s32 = sadd.s32 %s19, %s20
    %s33 = sadd.s32 %s31, %s27
    %s34 = ssub.s32 %s32, %s33
    %p35 = scmp.eq.s32.totalorder %s34, 0
    %s37 = sadd.s32 %s36, 1
    %s38 = scalar_select %p35, %s36, %s37
    %p41 = pneg %p35
    %p42 = scmp.eq.s32.totalorder %s12, 1
    %p43 = por %p41, %p42
    %p44 = scmp.ne.s32.totalorder %s36, %s39
    %p45 = scmp.eq.s32.totalorder %s12, 0
    %p46 = por %p44, %p45
    %p47 = scmp.ne.s32.totalorder %s36, %s39
    %p48 = scmp.eq.s32.totalorder %s17, 1
    %p49 = por %p47, %p48
    %p50 = scmp.ne.s32.totalorder %s39, %s40
    %p51 = scmp.eq.s32.totalorder %s17, 0
    %p52 = por %p50, %p51
    %p53 = scmp.ne.s32.totalorder %s39, %s40
    %p54 = scmp.eq.s32.totalorder %s18, 1
    %p55 = por %p53, %p54
    %p57 = scmp.ne.s32.totalorder %s40, %s56
    %p58 = scmp.eq.s32.totalorder %s18, 0
    %p59 = por %p57, %p58
    %s60 = ssub.s32 %s19, %s31
    %p61 = scmp.eq.s32.totalorder %s60, 0
    %s63 = sadd.s32 %s62, 1
    %s64 = scalar_select %p61, %s62, %s63
    %p67 = pneg %p61
    %p68 = scmp.eq.s32.totalorder %s12, 1
    %p69 = por %p67, %p68
    %p70 = scmp.ne.s32.totalorder %s62, %s65
    %p71 = scmp.eq.s32.totalorder %s12, 0
    %p72 = por %p70, %p71
    %p73 = scmp.ne.s32.totalorder %s62, %s65
    %p74 = scmp.eq.s32.totalorder %s17, 1
    %p75 = por %p73, %p74
    %p76 = scmp.ne.s32.totalorder %s65, %s66
    %p77 = scmp.eq.s32.totalorder %s17, 0
    %p78 = por %p76, %p77
    %p79 = scmp.ne.s32.totalorder %s65, %s66
    %p80 = scmp.eq.s32.totalorder %s18, 1
    %p81 = por %p79, %p80
    %p83 = scmp.ne.s32.totalorder %s66, %s82
    %p84 = scmp.eq.s32.totalorder %s18, 0
    %p85 = por %p83, %p84
    %s87 = sadd.s32 %s86, 1
    %p90 = scmp.eq.s32.totalorder %s12, 1
    %p91 = scmp.ne.s32.totalorder %s86, %s88
    %p92 = scmp.eq.s32.totalorder %s12, 0
    %p93 = por %p91, %p92
    %p94 = scmp.ne.s32.totalorder %s86, %s88
    %p95 = scmp.eq.s32.totalorder %s17, 1
    %p96 = por %p94, %p95
    %p97 = scmp.ne.s32.totalorder %s88, %s89
    %p98 = scmp.eq.s32.totalorder %s17, 0
    %p99 = por %p97, %p98
    %p100 = scmp.ne.s32.totalorder %s88, %s89
    %p101 = scmp.eq.s32.totalorder %s18, 1
    %p102 = por %p100, %p101
    %p104 = scmp.ne.s32.totalorder %s89, %s103
    %p105 = scmp.eq.s32.totalorder %s18, 0
    %p106 = por %p104, %p105
    %s108 = sadd.s32 %s107, 1
    %p111 = scmp.eq.s32.totalorder %s12, 1
    %p112 = scmp.ne.s32.totalorder %s107, %s109
    %p113 = scmp.eq.s32.totalorder %s12, 0
    %p114 = por %p112, %p113
    %p115 = scmp.ne.s32.totalorder %s107, %s109
    %p116 = scmp.eq.s32.totalorder %s17, 1
    %p117 = por %p115, %p116
    %p118 = scmp.ne.s32.totalorder %s109, %s110
    %p119 = scmp.eq.s32.totalorder %s17, 0
    %p120 = por %p118, %p119
    %p121 = scmp.ne.s32.totalorder %s109, %s110
    %p122 = scmp.eq.s32.totalorder %s18, 1
    %p123 = por %p121, %p122
    %p125 = scmp.ne.s32.totalorder %s110, %s124
    %p126 = scmp.eq.s32.totalorder %s18, 0
    %p127 = por %p125, %p126
    %s128 = sadd.s32 %s19, %s20
    %s129 = sadd.s32 %s31, %s27
    %s130 = ssub.s32 %s128, %s129
    %p131 = scmp.eq.s32.totalorder %s130, 0
    %s133 = sadd.s32 %s132, 1
    %s134 = scalar_select %p131, %s132, %s133
    %p137 = pneg %p131
    %p138 = scmp.eq.s32.totalorder %s12, 1
    %p139 = por %p137, %p138
    %p140 = scmp.ne.s32.totalorder %s132, %s135
    %p141 = scmp.eq.s32.totalorder %s12, 0
    %p142 = por %p140, %p141
    %p143 = scmp.ne.s32.totalorder %s132, %s135
    %p144 = scmp.eq.s32.totalorder %s17, 1
    %p145 = por %p143, %p144
    %p146 = scmp.ne.s32.totalorder %s135, %s136
    %p147 = scmp.eq.s32.totalorder %s17, 0
    %p148 = por %p146, %p147
    %p149 = scmp.ne.s32.totalorder %s135, %s136
    %p150 = scmp.eq.s32.totalorder %s18, 1
    %p151 = por %p149, %p150
    %p153 = scmp.ne.s32.totalorder %s136, %s152
    %p154 = scmp.eq.s32.totalorder %s18, 0
    %p155 = por %p153, %p154
    %s156 = sadd.s32 %s19, %s20
    %s157 = sadd.s32 %s31, %s27
    %s158 = ssub.s32 %s156, %s157
    %p159 = scmp.eq.s32.totalorder %s158, 0
    %s161 = sadd.s32 %s160, 1
    %s162 = scalar_select %p159, %s160, %s161
    %p165 = pneg %p159
    %p166 = scmp.eq.s32.totalorder %s12, 1
    %p167 = por %p165, %p166
    %p168 = scmp.ne.s32.totalorder %s160, %s163
    %p169 = scmp.eq.s32.totalorder %s12, 0
    %p170 = por %p168, %p169
    %p171 = scmp.ne.s32.totalorder %s160, %s163
    %p172 = scmp.eq.s32.totalorder %s17, 1
    %p173 = por %p171, %p172
    %p174 = scmp.ne.s32.totalorder %s163, %s164
    %p175 = scmp.eq.s32.totalorder %s17, 0
    %p176 = por %p174, %p175
    %p177 = scmp.ne.s32.totalorder %s163, %s164
    %p178 = scmp.eq.s32.totalorder %s18, 1
    %p179 = por %p177, %p178
    %p181 = scmp.ne.s32.totalorder %s164, %s180
    %p182 = scmp.eq.s32.totalorder %s18, 0
    %p183 = por %p181, %p182
    %p184 = scmp.le.s32.totalorder 1, %s12
    %p185 = scmp.lt.s32.totalorder %s12, 3
    %p186 = pnand %p184, %p185
    %p187 = pneg %p186
    // Predicated region
    $region9: #{gpt_forward.17} parent=5 // pred_check
      _
    $region10: #{gpt_forward.17} parent=5 // pred_check_branch
      %189 = sbr.rel (%p186) target = $region12
    $region11: #{gpt_forward.17} parent=5 // pred_region
      %s190 = ssub.s32 %s12, 1
      // Predicated region
      $region13: #{gpt_forward.17} parent=11 // pred_check
        %p191 = pneg %p99
      $region14: #{gpt_forward.17} parent=11 // pred_check_branch
        %193 = sbr.rel (%p191) target = $region16
      $region15: #{gpt_forward.17} parent=11 // pred_region
        _
      $region16: #{gpt_forward.17} parent=11 // pred_fallthru
        _
      // Predicated region
      $region17: #{gpt_forward.17} parent=11 // pred_check
        %p194 = pneg %p120
      $region18: #{gpt_forward.17} parent=11 // pred_check_branch
        %196 = sbr.rel (%p194) target = $region20
      $region19: #{gpt_forward.17} parent=11 // pred_region
        _
      $region20: #{gpt_forward.17} parent=11 // pred_fallthru
        _
    $region12: #{gpt_forward.17} parent=5 // pred_fallthru
      _
    %p197 = scmp.lt.s32.totalorder %s12, 2
    // Predicated region
    $region21: #{gpt_forward.17} parent=5 // pred_check
      %p198 = pneg %p197
    $region22: #{gpt_forward.17} parent=5 // pred_check_branch
      %200 = sbr.rel (%p198) target = $region24
    $region23: #{gpt_forward.17} parent=5 // pred_region
      // Predicated region
      $region25: #{gpt_forward.17} parent=23 // pred_check
        %p201 = pneg %p46
      $region26: #{gpt_forward.17} parent=23 // pred_check_branch
        %203 = sbr.rel (%p201) target = $region28
      $region27: #{gpt_forward.17} parent=23 // pred_region
        %s204 = sadd.s32 %s19, %s20
        %p205 = scmp.lt.s32.totalorder %s204, 1
        %s206 = scalar_select %p205, %s204, 1
        %s207 = smul.addr %s206, 8
        %s208 = scalar_lea.vmem %s0, %s207
        %s209 = sadd.s32 %s19, %s20
      $region28: #{gpt_forward.17} parent=23 // pred_fallthru
        _
      // Predicated region
      $region29: #{gpt_forward.17} parent=23 // pred_check
        %p210 = pneg %p72
      $region30: #{gpt_forward.17} parent=23 // pred_check_branch
        %212 = sbr.rel (%p210) target = $region32
      $region31: #{gpt_forward.17} parent=23 // pred_region
        %p213 = scmp.lt.s32.totalorder %s19, 1
        %s214 = scalar_select %p213, %s19, 1
        %s215 = scalar_lea.vmem %s1, %s214
      $region32: #{gpt_forward.17} parent=23 // pred_fallthru
        _
    $region24: #{gpt_forward.17} parent=5 // pred_fallthru
      _
    %p216 = scmp.le.s32.totalorder 1, %s12
    %p217 = scmp.lt.s32.totalorder %s12, 3
    %p218 = pnand %p216, %p217
    %p219 = pneg %p218
    // Predicated region
    $region33: #{gpt_forward.17} parent=5 // pred_check
      _
    $region34: #{gpt_forward.17} parent=5 // pred_check_branch
      %221 = sbr.rel (%p218) target = $region36
    $region35: #{gpt_forward.17} parent=5 // pred_region
      %s222 = ssub.s32 %s12, 1
      %s223 = sadd.s32 %s21, %s22
      %p224 = scmp.lt.s32.totalorder %s223, 1
      %s225 = scalar_select %p224, %s223, 1
      %s226 = smul.addr %s225, 8
      %s227 = scalar_lea.vmem %s0, %s226
      %p228 = pneg %p52
      %p229 = pneg %p49
      %p230 = scmp.lt.s32.totalorder %s21, 1
      %s231 = scalar_select %p230, %s21, 1
      %s232 = scalar_lea.vmem %s1, %s231
      %p233 = pneg %p78
      %p234 = pneg %p75
      %p235 = pneg %p99
      %p236 = pneg %p96
      %p237 = pneg %p120
      %p238 = pneg %p117
      %p239 = pneg %p148
      %p240 = pneg %p145
      %s241 = sadd.s32 %s21, %s22
      %p242 = scmp.lt.s32.totalorder %s241, 1
      %s243 = scalar_select %p242, %s241, 1
      %s244 = smul.addr %s243, 8
      %s245 = scalar_lea.vmem %s4, %s244
      %p246 = pneg %p176
      %p247 = pneg %p173
      %s248 = sadd.s32 %s21, %s22
      %p249 = scmp.lt.s32.totalorder %s248, 1
      %s250 = scalar_select %p249, %s248, 1
      %s251 = smul.addr %s250, 4
      %s252 = scalar_lea.vmem %s5, %s251
      %s253 = sadd.s32 %s21, %s22
      %p254 = scmp.lt.s32.totalorder %s253, 1
      %s255 = scalar_select %p254, %s253, 1
      %s256 = smul.addr %s255, 8
      %s257 = scalar_lea.vmem %s0, %s256
      %s258 = sadd.s32 %s21, %s22
      %p259 = scmp.lt.s32.totalorder %s21, 1
      %s260 = scalar_select %p259, %s21, 1
      %s261 = scalar_lea.vmem %s1, %s260
      %s262 = sadd.s32 %s21, %s22
      %p263 = scmp.lt.s32.totalorder %s262, 1
      %s264 = scalar_select %p263, %s262, 1
      %s265 = smul.addr %s264, 8
      %s266 = scalar_lea.vmem %s4, %s265
      %s267 = sadd.s32 %s21, %s22
      %s268 = sadd.s32 %s21, %s22
      %p269 = scmp.lt.s32.totalorder %s268, 1
      %s270 = scalar_select %p269, %s268, 1
      %s271 = smul.addr %s270, 4
      %s272 = scalar_lea.vmem %s5, %s271
      %s273 = sadd.s32 %s21, %s22
      %v274 = vld [vmem:[%s261] sm:$0x1]
      %v275 = vld [vmem:[%s257] sm:$0xff]
      %v277 = vlaneseq
      %v278 = vshrl.u32 %v277, 7
      %v279 = vsub.s32 0, %v278
      %v280 = vrot.slane %v274, %v279
      %v282 = vadd.f32 %v275, %v280
      %vm283 = vcmask 261120
      %v284 = vsel %vm283, %v282, 0.0
      %285 = vadd.xlane.f32.xlu0 %v284
      %v286 = vpop.xlane.xlu0 %285
      %v287 = vrcp.pop 32.0
      %v288 = vmul.f32 %v286, %v287
      %v289 = vsub.f32 %v282, %v288
      %v290 = vmul.f32 %v289, %v289
      %v291 = vsel %vm283, %v290, 0.0
      %292 = vadd.xlane.f32.xlu0 %v291
      %v293 = vpop.xlane.xlu0 %292
      %v294 = vmul.f32 %v293, %v287
      %v295 = vadd.f32 %v294, 1e-05
      %v296 = vrsqrt.pop %v295
      %v297 = vmul.f32 %v289, %v296
      %v298 = vld [vmem:[%s2] sm:$0x1]
      %v300 = vlaneseq
      %v301 = vshrl.u32 %v300, 7
      %v302 = vsub.s32 0, %v301
      %v303 = vrot.slane %v298, %v302
      %v305 = vmul.f32 %v297, %v303
      %v306 = vld [vmem:[%s3] sm:$0x1]
      %v308 = vlaneseq
      %v309 = vshrl.u32 %v308, 7
      %v310 = vsub.s32 0, %v309
      %v311 = vrot.slane %v306, %v310
      %v313 = vadd.f32 %v305, %v311
      %314 = vst.msk [vmem:[%s266] sm:$0xff] %vm283, %v313
      %v315 = vpack.c.bf16 %v313, %v313
      %vm316 = vcmask 257024
      %317 = vst.msk [vmem:[%s272] sm:$0xf] %vm316, %v315
      %s318 = sadd.s32 %s21, %s22
      %p319 = scmp.lt.s32.totalorder %s318, 1
      %s320 = scalar_select %p319, %s318, 1
      %s321 = smul.addr %s320, 8
      %s322 = scalar_lea.vmem %s4, %s321
      %s323 = sadd.s32 %s21, %s22
      %p324 = scmp.lt.s32.totalorder %s323, 1
      %s325 = scalar_select %p324, %s323, 1
      %s326 = smul.addr %s325, 4
      %s327 = scalar_lea.vmem %s5, %s326
      // Predicated region
      $region37: #{gpt_forward.17} parent=35 // pred_check
        %p328 = pneg %p145
      $region38: #{gpt_forward.17} parent=35 // pred_check_branch
        %330 = sbr.rel (%p328) target = $region40
      $region39: #{gpt_forward.17} parent=35 // pred_region
        %s331 = sadd.s32 %s21, %s22
      $region40: #{gpt_forward.17} parent=35 // pred_fallthru
        _
      // Predicated region
      $region41: #{gpt_forward.17} parent=35 // pred_check
        %p332 = pneg %p173
      $region42: #{gpt_forward.17} parent=35 // pred_check_branch
        %334 = sbr.rel (%p332) target = $region44
      $region43: #{gpt_forward.17} parent=35 // pred_region
        %s335 = sadd.s32 %s21, %s22
      $region44: #{gpt_forward.17} parent=35 // pred_fallthru
        _
    $region36: #{gpt_forward.17} parent=5 // pred_fallthru
      _
    %p336 = scmp.le.s32.totalorder 2, %s12
    // Predicated region
    $region45: #{gpt_forward.17} parent=5 // pred_check
      %p337 = pneg %p336
    $region46: #{gpt_forward.17} parent=5 // pred_check_branch
      %339 = sbr.rel (%p337) target = $region48
    $region47: #{gpt_forward.17} parent=5 // pred_region
      %s340 = ssub.s32 %s12, 2
      // Predicated region
      $region49: #{gpt_forward.17} parent=47 // pred_check
        %p341 = pneg %p151
      $region50: #{gpt_forward.17} parent=47 // pred_check_branch
        %343 = sbr.rel (%p341) target = $region52
      $region51: #{gpt_forward.17} parent=47 // pred_region
        %s344 = sadd.s32 %s23, %s24
        %p345 = scmp.lt.s32.totalorder %s344, 1
        %s346 = scalar_select %p345, %s344, 1
        %s347 = smul.addr %s346, 8
        %s348 = scalar_lea.vmem %s4, %s347
      $region52: #{gpt_forward.17} parent=47 // pred_fallthru
        _
      // Predicated region
      $region53: #{gpt_forward.17} parent=47 // pred_check
        %p349 = pneg %p179
      $region54: #{gpt_forward.17} parent=47 // pred_check_branch
        %351 = sbr.rel (%p349) target = $region56
      $region55: #{gpt_forward.17} parent=47 // pred_region
        %s352 = sadd.s32 %s23, %s24
        %p353 = scmp.lt.s32.totalorder %s352, 1
        %s354 = scalar_select %p353, %s352, 1
        %s355 = smul.addr %s354, 4
        %s356 = scalar_lea.vmem %s5, %s355
      $region56: #{gpt_forward.17} parent=47 // pred_fallthru
        _
    $region48: #{gpt_forward.17} parent=5 // pred_fallthru
      _
  $region6: #{gpt_forward.17} parent=0 // loop_footer
    %s16 = sadd.s32 1, %s12
  $region7: #{gpt_forward.17} parent=0 // loop_footer_branch
    %11 = sbr.rel target = $region3
  $region8: #{gpt_forward.17} parent=0 // loop_exit
    _

// kernel: gpt_forward.18
$region0: #{gpt_forward.18}
  #allocation0 [shape = 'u32[]', space=smem, size = 0x4, offset = 0x4, fixed_abs, tag = 'smem constant byte address 0x4 - core index']
  #allocation1 [shape = 'u32[144,128]{1,0:T(1,128)}', space=vmem, size = 0x12000, scoped, tag = 'internal scratch']
  #allocation2 [shape = 'f32[16,64]{1,0:T(8,128)}', space=vmem, size = 0x2000, scoped, tag = 'scratch operand']
  %s0 = inlined_call_operand.vmem [shape: bf16[16,32], index: 0, kind: input, shape index: {}]
  %s1 = inlined_call_operand.vmem [shape: bf16[32,64], index: 1, kind: input, shape index: {}]
  %s2 = inlined_call_operand.vmem [shape: f32[1,64], index: 2, kind: input, shape index: {}]
  %s3 = inlined_call_operand.vmem [shape: bf16[16,64], index: 3, kind: output, shape index: {}]
  %s4 = sld [smem:[#allocation0]]
  $region30: #{gpt_forward.18} parent=0
    _
  %s6 = ssub.s32 1, %s4
  %s7 = scalar_select 0, %s6, %s4
  // Predicated region
  $region2: #{gpt_forward.18} parent=0 // pred_check
    _
  $region3: #{gpt_forward.18} parent=0 // pred_check_branch
    %9 = sbr.rel (0) target = $region5
  $region4: #{gpt_forward.18} parent=0 // pred_region
    _
  $region5: #{gpt_forward.18} parent=0 // pred_fallthru
    _
  // Predicated region
  $region6: #{gpt_forward.18} parent=0 // pred_check
    _
  $region7: #{gpt_forward.18} parent=0 // pred_check_branch
    %11 = sbr.rel (0) target = $region9
  $region8: #{gpt_forward.18} parent=0 // pred_region
    _
  $region9: #{gpt_forward.18} parent=0 // pred_fallthru
    _
  // Predicated region
  $region10: #{gpt_forward.18} parent=0 // pred_check
    _
  $region11: #{gpt_forward.18} parent=0 // pred_check_branch
    %13 = sbr.rel (0) target = $region13
  $region12: #{gpt_forward.18} parent=0 // pred_region
    _
  $region13: #{gpt_forward.18} parent=0 // pred_fallthru
    _
  %p15 = scmp.eq.s32.totalorder 0, 0
  // Predicated region
  $region14: #{gpt_forward.18} parent=0 // pred_check
    %p16 = pneg %p15
  $region15: #{gpt_forward.18} parent=0 // pred_check_branch
    %18 = sbr.rel (%p16) target = $region17
  $region16: #{gpt_forward.18} parent=0 // pred_region
    %vm19 = vcmask 523264
    %20 = vst.msk [vmem:[#allocation2] sm:$0xff] %vm19, 0.0
    %21 = vst.msk [vmem:[#allocation2 + $0x8] sm:$0xff] %vm19, 0.0
  $region17: #{gpt_forward.18} parent=0 // pred_fallthru
    _
  %v22 = vld [vmem:[#allocation2] sm:$0xff]
  %v23 = vld [vmem:[#allocation2 + $0x8] sm:$0xff]
  %v24 = vld [vmem:[%s0] sm:$0xf]
  %v25 = vld [vmem:[%s0 + $0x4] sm:$0xf]
  %v26 = vld [vmem:[%s1] sm:$0xf]
  %v27 = vld [vmem:[%s1 + $0x4] sm:$0xf]
  %v28 = vld [vmem:[%s1 + $0x8] sm:$0xf]
  %v29 = vld [vmem:[%s1 + $0xc] sm:$0xf]
  %v32 = vunpack.c.l.b16 %v24
  %v33 = vunpack.c.l.b16 %v25
  %v34 = vpack.c.b16 %v33, %v32
  %v39 = vunpack.c.l.b16 %v26
  %v40 = vunpack.c.l.b16 %v27
  %v41 = vunpack.c.l.b16 %v28
  %v42 = vunpack.c.l.b16 %v29
  %v43 = vpack.c.b16 %v40, %v39
  %v44 = vpack.c.b16 %v42, %v41
  %vm47 = vcmask 261120
  %v49 = vsel %vm47, %v34, 0
  %51 = vmatprep.subr.bf16.mxu0 0
  %52 = vmatpush1.bf16.msra.mxu0 %v43
  %53 = vmatprep.subr.bf16.mxu0 0
  %54 = vmatpush1.bf16.msra.mxu0 %v44
  %55 = vmatprep.subr.bf16.mxu0 0
  %56 = vmatpush1.bf16.msra.mxu0 0
  %57 = vmatprep.subr.bf16.mxu0 0
  %58 = vmatpush1.bf16.msra.mxu0 0
  %59 = vmatprep.subr.bf16.mxu0 0
  %60 = vmatpush1.bf16.msra.mxu0 0
  %61 = vmatprep.subr.bf16.mxu0 0
  %62 = vmatpush1.bf16.msra.mxu0 0
  %63 = vmatprep.subr.bf16.mxu0 0
  %64 = vmatpush1.bf16.msra.mxu0 0
  %65 = vmatprep.subr.bf16.mxu0 0
  %66 = vmatpush1.bf16.msra.mxu0 0
  %67 = vmatprep.subr.bf16.mxu0 0
  %68 = vmatpush1.bf16.msra.mxu0 0
  %69 = vmatprep.subr.bf16.mxu0 0
  %70 = vmatpush1.bf16.msra.mxu0 0
  %71 = vmatprep.subr.bf16.mxu0 0
  %72 = vmatpush1.bf16.msra.mxu0 0
  %73 = vmatprep.subr.bf16.mxu0 0
  %74 = vmatpush1.bf16.msra.mxu0 0
  %75 = vmatprep.subr.bf16.mxu0 0
  %76 = vmatpush1.bf16.msra.mxu0 0
  %77 = vmatprep.subr.bf16.mxu0 0
  %78 = vmatpush1.bf16.msra.mxu0 0
  %79 = vmatprep.subr.bf16.mxu0 0
  %80 = vmatpush1.bf16.msra.mxu0 0
  %81 = vmatprep.subr.bf16.mxu0 0
  %82 = vmatpush1.bf16.msra.mxu0 0
  %83 = vmatprep.mubr.bf16.mxu0 0
  %84 = vmatmul.mubr.bf16.gmra.mrb[0].mxu0 %v49
  %v85 = vpop.f32.mrb[0].mxu0
  %v86 = vadd.f32 0.0, %v85
  %v87 = vpop.f32.mrb[0].mxu0
  %v88 = vpop.f32.mrb[0].mxu0
  %v89 = vadd.f32 0.0, %v88
  %v90 = vpop.f32.mrb[0].mxu0
  %91 = vdwg.mxu0
  %v92 = vadd.f32 %v22, %v86
  %v93 = vadd.f32 %v23, %v89
  %vm94 = vcmask 523264
  %95 = vst.msk [vmem:[#allocation2] sm:$0xff] %vm94, %v92
  %96 = vst.msk [vmem:[#allocation2 + $0x8] sm:$0xff] %vm94, %v93
  // Predicated region
  $region18: #{gpt_forward.18} parent=0 // pred_check
    %p97 = pneg %p15
  $region19: #{gpt_forward.18} parent=0 // pred_check_branch
    %99 = sbr.rel (%p97) target = $region21
  $region20: #{gpt_forward.18} parent=0 // pred_region
    %v100 = vld [vmem:[#allocation2] sm:$0xff]
    %v101 = vld [vmem:[#allocation2 + $0x8] sm:$0xff]
    %v102 = vld [vmem:[%s2] sm:$0x1]
    %v104 = vlaneseq
    %v105 = vshrl.u32 %v104, 7
    %v106 = vsub.s32 0, %v105
    %v107 = vrot.slane %v102, %v106
    %v109 = vadd.f32 %v100, %v107
    %v110 = vadd.f32 %v101, %v107
    %v111 = vmul.f32 %v109, 0.5
    %v112 = vmul.f32 %v110, 0.5
    %v113 = vmul.f32 %v109, 0.044715
    %v114 = vmul.f32 %v110, 0.044715
    %v115 = vmul.f32 %v113, %v109
    %v116 = vmul.f32 %v114, %v110
    %v117 = vmul.f32 %v115, %v109
    %v118 = vmul.f32 %v116, %v110
    %v119 = vadd.f32 %v109, %v117
    %v120 = vadd.f32 %v110, %v118
    %v121 = vmul.f32 %v119, 0.7978846
    %v122 = vmul.f32 %v120, 0.7978846
    %v123 = vtanh.pop %v121
    %v124 = vtanh.pop %v122
    %v125 = vadd.f32 %v123, 1.0
    %v126 = vadd.f32 %v124, 1.0
    %v127 = vmul.f32 %v111, %v125
    %v128 = vmul.f32 %v112, %v126
    %v129 = vpack.c.bf16 %v128, %v127
    %v131 = vunpack.c.l.b16 %v129
    %v132 = vunpack.c.h.b16 %v129
    %v133 = vpack.c.b16 %v131, %v131
    %v134 = vpack.c.b16 %v132, %v132
    %vm137 = vcmask 519168
    %138 = vst.msk [vmem:[%s3] sm:$0xf] %vm137, %v133
    %139 = vst.msk [vmem:[%s3 + $0x4] sm:$0xf] %vm137, %v134
  $region21: #{gpt_forward.18} parent=0 // pred_fallthru
    _
  // Predicated region
  $region22: #{gpt_forward.18} parent=0 // pred_check
    _
  $region23: #{gpt_forward.18} parent=0 // pred_check_branch
    %141 = sbr.rel (0) target = $region25
  $region24: #{gpt_forward.18} parent=0 // pred_region
    _
  $region25: #{gpt_forward.18} parent=0 // pred_fallthru
    _
  // Predicated region
  $region26: #{gpt_forward.18} parent=0 // pred_check
    _
  $region27: #{gpt_forward.18} parent=0 // pred_check_branch
    %143 = sbr.rel (0) target = $region29
  $region28: #{gpt_forward.18} parent=0 // pred_region
    _
  $region29: #{gpt_forward.18} parent=0 // pred_fallthru
    _

// kernel: gpt_forward.19
$region0: #{gpt_forward.19}
  #allocation0 [shape = 'u32[]', space=smem, size = 0x4, offset = 0x4, fixed_abs, tag = 'smem constant byte address 0x4 - core index']
  #allocation1 [shape = 'u32[144,128]{1,0:T(1,128)}', space=vmem, size = 0x12000, scoped, tag = 'internal scratch']
  #allocation2 [shape = 'f32[16,32]{1,0:T(8,128)}', space=vmem, size = 0x2000, scoped, tag = 'scratch operand']
  %s0 = inlined_call_operand.vmem [shape: bf16[16,64], index: 0, kind: input, shape index: {}]
  %s1 = inlined_call_operand.vmem [shape: bf16[64,32], index: 1, kind: input, shape index: {}]
  %s2 = inlined_call_operand.vmem [shape: f32[1,32], index: 2, kind: input, shape index: {}]
  %s3 = inlined_call_operand.vmem [shape: bf16[16,32], index: 3, kind: output, shape index: {}]
  %s4 = sld [smem:[#allocation0]]
  $region30: #{gpt_forward.19} parent=0
    _
  %s6 = ssub.s32 1, %s4
  %s7 = scalar_select 0, %s6, %s4
  // Predicated region
  $region2: #{gpt_forward.19} parent=0 // pred_check
    _
  $region3: #{gpt_forward.19} parent=0 // pred_check_branch
    %9 = sbr.rel (0) target = $region5
  $region4: #{gpt_forward.19} parent=0 // pred_region
    _
  $region5: #{gpt_forward.19} parent=0 // pred_fallthru
    _
  // Predicated region
  $region6: #{gpt_forward.19} parent=0 // pred_check
    _
  $region7: #{gpt_forward.19} parent=0 // pred_check_branch
    %11 = sbr.rel (0) target = $region9
  $region8: #{gpt_forward.19} parent=0 // pred_region
    _
  $region9: #{gpt_forward.19} parent=0 // pred_fallthru
    _
  // Predicated region
  $region10: #{gpt_forward.19} parent=0 // pred_check
    _
  $region11: #{gpt_forward.19} parent=0 // pred_check_branch
    %13 = sbr.rel (0) target = $region13
  $region12: #{gpt_forward.19} parent=0 // pred_region
    _
  $region13: #{gpt_forward.19} parent=0 // pred_fallthru
    _
  %p15 = scmp.eq.s32.totalorder 0, 0
  // Predicated region
  $region14: #{gpt_forward.19} parent=0 // pred_check
    %p16 = pneg %p15
  $region15: #{gpt_forward.19} parent=0 // pred_check_branch
    %18 = sbr.rel (%p16) target = $region17
  $region16: #{gpt_forward.19} parent=0 // pred_region
    %vm19 = vcmask 261120
    %20 = vst.msk [vmem:[#allocation2] sm:$0xff] %vm19, 0.0
    %21 = vst.msk [vmem:[#allocation2 + $0x8] sm:$0xff] %vm19, 0.0
  $region17: #{gpt_forward.19} parent=0 // pred_fallthru
    _
  %v22 = vld [vmem:[#allocation2] sm:$0xff]
  %v23 = vld [vmem:[#allocation2 + $0x8] sm:$0xff]
  %v24 = vld [vmem:[%s0] sm:$0xf]
  %v25 = vld [vmem:[%s0 + $0x4] sm:$0xf]
  %v26 = vld [vmem:[%s1] sm:$0xf]
  %v27 = vld [vmem:[%s1 + $0x4] sm:$0xf]
  %v28 = vld [vmem:[%s1 + $0x8] sm:$0xf]
  %v29 = vld [vmem:[%s1 + $0xc] sm:$0xf]
  %v30 = vld [vmem:[%s1 + $0x10] sm:$0xf]
  %v31 = vld [vmem:[%s1 + $0x14] sm:$0xf]
  %v32 = vld [vmem:[%s1 + $0x18] sm:$0xf]
  %v33 = vld [vmem:[%s1 + $0x1c] sm:$0xf]
  %v36 = vunpack.c.l.b16 %v24
  %v37 = vunpack.c.l.b16 %v25
  %v38 = vpack.c.b16 %v37, %v36
  %v47 = vunpack.c.l.b16 %v26
  %v48 = vunpack.c.l.b16 %v27
  %v49 = vunpack.c.l.b16 %v28
  %v50 = vunpack.c.l.b16 %v29
  %v51 = vunpack.c.l.b16 %v30
  %v52 = vunpack.c.l.b16 %v31
  %v53 = vunpack.c.l.b16 %v32
  %v54 = vunpack.c.l.b16 %v33
  %v55 = vpack.c.b16 %v48, %v47
  %v56 = vpack.c.b16 %v50, %v49
  %v57 = vpack.c.b16 %v52, %v51
  %v58 = vpack.c.b16 %v54, %v53
  %vm63 = vcmask 523264
  %v65 = vsel %vm63, %v38, 0
  %67 = vmatprep.subr.bf16.mxu0 0
  %68 = vmatpush1.bf16.msra.mxu0 %v55
  %69 = vmatprep.subr.bf16.mxu0 0
  %70 = vmatpush1.bf16.msra.mxu0 %v56
  %71 = vmatprep.subr.bf16.mxu0 0
  %72 = vmatpush1.bf16.msra.mxu0 %v57
  %73 = vmatprep.subr.bf16.mxu0 0
  %74 = vmatpush1.bf16.msra.mxu0 %v58
  %75 = vmatprep.subr.bf16.mxu0 0
  %76 = vmatpush1.bf16.msra.mxu0 0
  %77 = vmatprep.subr.bf16.mxu0 0
  %78 = vmatpush1.bf16.msra.mxu0 0
  %79 = vmatprep.subr.bf16.mxu0 0
  %80 = vmatpush1.bf16.msra.mxu0 0
  %81 = vmatprep.subr.bf16.mxu0 0
  %82 = vmatpush1.bf16.msra.mxu0 0
  %83 = vmatprep.subr.bf16.mxu0 0
  %84 = vmatpush1.bf16.msra.mxu0 0
  %85 = vmatprep.subr.bf16.mxu0 0
  %86 = vmatpush1.bf16.msra.mxu0 0
  %87 = vmatprep.subr.bf16.mxu0 0
  %88 = vmatpush1.bf16.msra.mxu0 0
  %89 = vmatprep.subr.bf16.mxu0 0
  %90 = vmatpush1.bf16.msra.mxu0 0
  %91 = vmatprep.subr.bf16.mxu0 0
  %92 = vmatpush1.bf16.msra.mxu0 0
  %93 = vmatprep.subr.bf16.mxu0 0
  %94 = vmatpush1.bf16.msra.mxu0 0
  %95 = vmatprep.subr.bf16.mxu0 0
  %96 = vmatpush1.bf16.msra.mxu0 0
  %97 = vmatprep.subr.bf16.mxu0 0
  %98 = vmatpush1.bf16.msra.mxu0 0
  %99 = vmatprep.mubr.bf16.mxu0 0
  %100 = vmatmul.mubr.bf16.gmra.mrb[0].mxu0 %v65
  %v101 = vpop.f32.mrb[0].mxu0
  %v102 = vadd.f32 0.0, %v101
  %v103 = vpop.f32.mrb[0].mxu0
  %v104 = vpop.f32.mrb[0].mxu0
  %v105 = vadd.f32 0.0, %v104
  %v106 = vpop.f32.mrb[0].mxu0
  %107 = vdwg.mxu0
  %v108 = vadd.f32 %v22, %v102
  %v109 = vadd.f32 %v23, %v105
  %vm110 = vcmask 261120
  %111 = vst.msk [vmem:[#allocation2] sm:$0xff] %vm110, %v108
  %112 = vst.msk [vmem:[#allocation2 + $0x8] sm:$0xff] %vm110, %v109
  // Predicated region
  $region18: #{gpt_forward.19} parent=0 // pred_check
    %p113 = pneg %p15
  $region19: #{gpt_forward.19} parent=0 // pred_check_branch
    %115 = sbr.rel (%p113) target = $region21
  $region20: #{gpt_forward.19} parent=0 // pred_region
    %v116 = vld [vmem:[#allocation2] sm:$0xff]
    %v117 = vld [vmem:[#allocation2 + $0x8] sm:$0xff]
    %v118 = vld [vmem:[%s2] sm:$0x1]
    %v120 = vlaneseq
    %v121 = vshrl.u32 %v120, 7
    %v122 = vsub.s32 0, %v121
    %v123 = vrot.slane %v118, %v122
    %v125 = vadd.f32 %v116, %v123
    %v126 = vadd.f32 %v117, %v123
    %v127 = vpack.c.bf16 %v126, %v125
    %v129 = vunpack.c.l.b16 %v127
    %v130 = vunpack.c.h.b16 %v127
    %v131 = vpack.c.b16 %v129, %v129
    %v132 = vpack.c.b16 %v130, %v130
    %vm135 = vcmask 257024
    %136 = vst.msk [vmem:[%s3] sm:$0xf] %vm135, %v131
    %137 = vst.msk [vmem:[%s3 + $0x4] sm:$0xf] %vm135, %v132
  $region21: #{gpt_forward.19} parent=0 // pred_fallthru
    _
  // Predicated region
  $region22: #{gpt_forward.19} parent=0 // pred_check
    _
  $region23: #{gpt_forward.19} parent=0 // pred_check_branch
    %139 = sbr.rel (0) target = $region25
  $region24: #{gpt_forward.19} parent=0 // pred_region
    _
  $region25: #{gpt_forward.19} parent=0 // pred_fallthru
    _
  // Predicated region
  $region26: #{gpt_forward.19} parent=0 // pred_check
    _
  $region27: #{gpt_forward.19} parent=0 // pred_check_branch
    %141 = sbr.rel (0) target = $region29
  $region28: #{gpt_forward.19} parent=0 // pred_region
    _
  $region29: #{gpt_forward.19} parent=0 // pred_fallthru
    _

// kernel: gpt_forward.20
$region0: #{gpt_forward.20}
  #allocation0 [shape = 'u32[]', space=smem, size = 0x4, offset = 0x4, fixed_abs, tag = 'smem constant byte address 0x4 - core index']
  #allocation1 [shape = 'u32[144,128]{1,0:T(1,128)}', space=vmem, size = 0x12000, scoped, tag = 'internal scratch']
  %s0 = inlined_call_operand.vmem [shape: f32[16,32], index: 0, kind: input, shape index: {}]
  %s1 = inlined_call_operand.vmem [shape: bf16[16,32], index: 1, kind: input, shape index: {}]
  %s2 = inlined_call_operand.vmem [shape: f32[1,32], index: 2, kind: input, shape index: {}]
  %s3 = inlined_call_operand.vmem [shape: f32[1,32], index: 3, kind: input, shape index: {}]
  %s4 = inlined_call_operand.vmem [shape: f32[16,32], index: 4, kind: output, shape index: {0}]
  %s5 = inlined_call_operand.vmem [shape: bf16[16,32], index: 5, kind: output, shape index: {1}]
  %6 = xla_tuple %s4, %s5
  %s7 = sld [smem:[#allocation0]]
  $region57: #{gpt_forward.20} parent=0
    _
  %s9 = ssub.s32 1, %s7
  %s10 = scalar_select 0, %s9, %s7
  loop: start=0, step=1, limit=4
  $region2: #{gpt_forward.20} parent=0 // loop_pre_header
    _
  $region3: #{gpt_forward.20} parent=0 // loop_header
    %s12 = sphi 0, %s16
    %p13 = scmp.ge.s32.totalorder %s12, 4
    %s19 = sphi 0, %s31
    %s20 = sphi 0, %s27
    %s21 = sphi 0, %s19
    %s22 = sphi 0, %s20
    %s23 = sphi 0, %s21
    %s24 = sphi 0, %s22
    %s36 = sphi 0, %s38
    %s39 = sphi 0, %s36
    %s40 = sphi 0, %s39
    %s56 = sphi 0, %s40
    %s64 = sphi 0, %s66
    %s67 = sphi 0, %s64
    %s68 = sphi 0, %s67
    %s84 = sphi 0, %s68
    %s88 = sphi 0, %s88
    %s90 = sphi 0, %s88
    %s91 = sphi 0, %s90
    %s105 = sphi 0, %s91
    %s109 = sphi 0, %s109
    %s111 = sphi 0, %s109
    %s112 = sphi 0, %s111
    %s126 = sphi 0, %s112
    %s134 = sphi 0, %s136
    %s137 = sphi 0, %s134
    %s138 = sphi 0, %s137
    %s154 = sphi 0, %s138
    %s162 = sphi 0, %s164
    %s165 = sphi 0, %s162
    %s166 = sphi 0, %s165
    %s182 = sphi 0, %s166
  $region4: #{gpt_forward.20} parent=0 // loop_header_branch
    %15 = sbr.rel (%p13) target = $region8
  $region5: #{gpt_forward.20} parent=0 // loop_body
    %s17 = ssub.s32 %s12, 1
    %s18 = ssub.s32 %s12, 2
    %s25 = sadd.s32 1, %s20
    %p26 = scmp.ge.s32.totalorder %s25, 1
    %s27 = scalar_select %p26, 0, %s25
    %s28 = sadd.s32 1, %s19
    %s29 = scalar_select %p26, %s28, %s19
    %p30 = scmp.ge.s32.totalorder %s29, 2
    %s31 = scalar_select %p30, 0, %s29
    %s32 = sadd.s32 %s19, %s20
    %s33 = sadd.s32 %s31, %s27
    %s34 = ssub.s32 %s32, %s33
    %p35 = scmp.eq.s32.totalorder %s34, 0
    %s37 = sadd.s32 %s36, 1
    %s38 = scalar_select %p35, %s36, %s37
    %p41 = pneg %p35
    %p42 = scmp.eq.s32.totalorder %s12, 1
    %p43 = por %p41, %p42
    %p44 = scmp.ne.s32.totalorder %s36, %s39
    %p45 = scmp.eq.s32.totalorder %s12, 0
    %p46 = por %p44, %p45
    %p47 = scmp.ne.s32.totalorder %s36, %s39
    %p48 = scmp.eq.s32.totalorder %s17, 1
    %p49 = por %p47, %p48
    %p50 = scmp.ne.s32.totalorder %s39, %s40
    %p51 = scmp.eq.s32.totalorder %s17, 0
    %p52 = por %p50, %p51
    %p53 = scmp.ne.s32.totalorder %s39, %s40
    %p54 = scmp.eq.s32.totalorder %s18, 1
    %p55 = por %p53, %p54
    %p57 = scmp.ne.s32.totalorder %s40, %s56
    %p58 = scmp.eq.s32.totalorder %s18, 0
    %p59 = por %p57, %p58
    %s60 = sadd.s32 %s19, %s20
    %s61 = sadd.s32 %s31, %s27
    %s62 = ssub.s32 %s60, %s61
    %p63 = scmp.eq.s32.totalorder %s62, 0
    %s65 = sadd.s32 %s64, 1
    %s66 = scalar_select %p63, %s64, %s65
    %p69 = pneg %p63
    %p70 = scmp.eq.s32.totalorder %s12, 1
    %p71 = por %p69, %p70
    %p72 = scmp.ne.s32.totalorder %s64, %s67
    %p73 = scmp.eq.s32.totalorder %s12, 0
    %p74 = por %p72, %p73
    %p75 = scmp.ne.s32.totalorder %s64, %s67
    %p76 = scmp.eq.s32.totalorder %s17, 1
    %p77 = por %p75, %p76
    %p78 = scmp.ne.s32.totalorder %s67, %s68
    %p79 = scmp.eq.s32.totalorder %s17, 0
    %p80 = por %p78, %p79
    %p81 = scmp.ne.s32.totalorder %s67, %s68
    %p82 = scmp.eq.s32.totalorder %s18, 1
    %p83 = por %p81, %p82
    %p85 = scmp.ne.s32.totalorder %s68, %s84
    %p86 = scmp.eq.s32.totalorder %s18, 0
    %p87 = por %p85, %p86
    %s89 = sadd.s32 %s88, 1
    %p92 = scmp.eq.s32.totalorder %s12, 1
    %p93 = scmp.ne.s32.totalorder %s88, %s90
    %p94 = scmp.eq.s32.totalorder %s12, 0
    %p95 = por %p93, %p94
    %p96 = scmp.ne.s32.totalorder %s88, %s90
    %p97 = scmp.eq.s32.totalorder %s17, 1
    %p98 = por %p96, %p97
    %p99 = scmp.ne.s32.totalorder %s90, %s91
    %p100 = scmp.eq.s32.totalorder %s17, 0
    %p101 = por %p99, %p100
    %p102 = scmp.ne.s32.totalorder %s90, %s91
    %p103 = scmp.eq.s32.totalorder %s18, 1
    %p104 = por %p102, %p103
    %p106 = scmp.ne.s32.totalorder %s91, %s105
    %p107 = scmp.eq.s32.totalorder %s18, 0
    %p108 = por %p106, %p107
    %s110 = sadd.s32 %s109, 1
    %p113 = scmp.eq.s32.totalorder %s12, 1
    %p114 = scmp.ne.s32.totalorder %s109, %s111
    %p115 = scmp.eq.s32.totalorder %s12, 0
    %p116 = por %p114, %p115
    %p117 = scmp.ne.s32.totalorder %s109, %s111
    %p118 = scmp.eq.s32.totalorder %s17, 1
    %p119 = por %p117, %p118
    %p120 = scmp.ne.s32.totalorder %s111, %s112
    %p121 = scmp.eq.s32.totalorder %s17, 0
    %p122 = por %p120, %p121
    %p123 = scmp.ne.s32.totalorder %s111, %s112
    %p124 = scmp.eq.s32.totalorder %s18, 1
    %p125 = por %p123, %p124
    %p127 = scmp.ne.s32.totalorder %s112, %s126
    %p128 = scmp.eq.s32.totalorder %s18, 0
    %p129 = por %p127, %p128
    %s130 = sadd.s32 %s19, %s20
    %s131 = sadd.s32 %s31, %s27
    %s132 = ssub.s32 %s130, %s131
    %p133 = scmp.eq.s32.totalorder %s132, 0
    %s135 = sadd.s32 %s134, 1
    %s136 = scalar_select %p133, %s134, %s135
    %p139 = pneg %p133
    %p140 = scmp.eq.s32.totalorder %s12, 1
    %p141 = por %p139, %p140
    %p142 = scmp.ne.s32.totalorder %s134, %s137
    %p143 = scmp.eq.s32.totalorder %s12, 0
    %p144 = por %p142, %p143
    %p145 = scmp.ne.s32.totalorder %s134, %s137
    %p146 = scmp.eq.s32.totalorder %s17, 1
    %p147 = por %p145, %p146
    %p148 = scmp.ne.s32.totalorder %s137, %s138
    %p149 = scmp.eq.s32.totalorder %s17, 0
    %p150 = por %p148, %p149
    %p151 = scmp.ne.s32.totalorder %s137, %s138
    %p152 = scmp.eq.s32.totalorder %s18, 1
    %p153 = por %p151, %p152
    %p155 = scmp.ne.s32.totalorder %s138, %s154
    %p156 = scmp.eq.s32.totalorder %s18, 0
    %p157 = por %p155, %p156
    %s158 = sadd.s32 %s19, %s20
    %s159 = sadd.s32 %s31, %s27
    %s160 = ssub.s32 %s158, %s159
    %p161 = scmp.eq.s32.totalorder %s160, 0
    %s163 = sadd.s32 %s162, 1
    %s164 = scalar_select %p161, %s162, %s163
    %p167 = pneg %p161
    %p168 = scmp.eq.s32.totalorder %s12, 1
    %p169 = por %p167, %p168
    %p170 = scmp.ne.s32.totalorder %s162, %s165
    %p171 = scmp.eq.s32.totalorder %s12, 0
    %p172 = por %p170, %p171
    %p173 = scmp.ne.s32.totalorder %s162, %s165
    %p174 = scmp.eq.s32.totalorder %s17, 1
    %p175 = por %p173, %p174
    %p176 = scmp.ne.s32.totalorder %s165, %s166
    %p177 = scmp.eq.s32.totalorder %s17, 0
    %p178 = por %p176, %p177
    %p179 = scmp.ne.s32.totalorder %s165, %s166
    %p180 = scmp.eq.s32.totalorder %s18, 1
    %p181 = por %p179, %p180
    %p183 = scmp.ne.s32.totalorder %s166, %s182
    %p184 = scmp.eq.s32.totalorder %s18, 0
    %p185 = por %p183, %p184
    %p186 = scmp.le.s32.totalorder 1, %s12
    %p187 = scmp.lt.s32.totalorder %s12, 3
    %p188 = pnand %p186, %p187
    %p189 = pneg %p188
    // Predicated region
    $region9: #{gpt_forward.20} parent=5 // pred_check
      _
    $region10: #{gpt_forward.20} parent=5 // pred_check_branch
      %191 = sbr.rel (%p188) target = $region12
    $region11: #{gpt_forward.20} parent=5 // pred_region
      %s192 = ssub.s32 %s12, 1
      // Predicated region
      $region13: #{gpt_forward.20} parent=11 // pred_check
        %p193 = pneg %p101
      $region14: #{gpt_forward.20} parent=11 // pred_check_branch
        %195 = sbr.rel (%p193) target = $region16
      $region15: #{gpt_forward.20} parent=11 // pred_region
        _
      $region16: #{gpt_forward.20} parent=11 // pred_fallthru
        _
      // Predicated region
      $region17: #{gpt_forward.20} parent=11 // pred_check
        %p196 = pneg %p122
      $region18: #{gpt_forward.20} parent=11 // pred_check_branch
        %198 = sbr.rel (%p196) target = $region20
      $region19: #{gpt_forward.20} parent=11 // pred_region
        _
      $region20: #{gpt_forward.20} parent=11 // pred_fallthru
        _
    $region12: #{gpt_forward.20} parent=5 // pred_fallthru
      _
    %p199 = scmp.lt.s32.totalorder %s12, 2
    // Predicated region
    $region21: #{gpt_forward.20} parent=5 // pred_check
      %p200 = pneg %p199
    $region22: #{gpt_forward.20} parent=5 // pred_check_branch
      %202 = sbr.rel (%p200) target = $region24
    $region23: #{gpt_forward.20} parent=5 // pred_region
      // Predicated region
      $region25: #{gpt_forward.20} parent=23 // pred_check
        %p203 = pneg %p46
      $region26: #{gpt_forward.20} parent=23 // pred_check_branch
        %205 = sbr.rel (%p203) target = $region28
      $region27: #{gpt_forward.20} parent=23 // pred_region
        %s206 = sadd.s32 %s19, %s20
        %p207 = scmp.lt.s32.totalorder %s206, 1
        %s208 = scalar_select %p207, %s206, 1
        %s209 = smul.addr %s208, 8
        %s210 = scalar_lea.vmem %s0, %s209
        %s211 = sadd.s32 %s19, %s20
      $region28: #{gpt_forward.20} parent=23 // pred_fallthru
        _
      // Predicated region
      $region29: #{gpt_forward.20} parent=23 // pred_check
        %p212 = pneg %p74
      $region30: #{gpt_forward.20} parent=23 // pred_check_branch
        %214 = sbr.rel (%p212) target = $region32
      $region31: #{gpt_forward.20} parent=23 // pred_region
        %s215 = sadd.s32 %s19, %s20
        %p216 = scmp.lt.s32.totalorder %s215, 1
        %s217 = scalar_select %p216, %s215, 1
        %s218 = smul.addr %s217, 4
        %s219 = scalar_lea.vmem %s1, %s218
        %s220 = sadd.s32 %s19, %s20
      $region32: #{gpt_forward.20} parent=23 // pred_fallthru
        _
    $region24: #{gpt_forward.20} parent=5 // pred_fallthru
      _
    %p221 = scmp.le.s32.totalorder 1, %s12
    %p222 = scmp.lt.s32.totalorder %s12, 3
    %p223 = pnand %p221, %p222
    %p224 = pneg %p223
    // Predicated region
    $region33: #{gpt_forward.20} parent=5 // pred_check
      _
    $region34: #{gpt_forward.20} parent=5 // pred_check_branch
      %226 = sbr.rel (%p223) target = $region36
    $region35: #{gpt_forward.20} parent=5 // pred_region
      %s227 = ssub.s32 %s12, 1
      %s228 = sadd.s32 %s21, %s22
      %p229 = scmp.lt.s32.totalorder %s228, 1
      %s230 = scalar_select %p229, %s228, 1
      %s231 = smul.addr %s230, 8
      %s232 = scalar_lea.vmem %s0, %s231
      %p233 = pneg %p52
      %p234 = pneg %p49
      %s235 = sadd.s32 %s21, %s22
      %p236 = scmp.lt.s32.totalorder %s235, 1
      %s237 = scalar_select %p236, %s235, 1
      %s238 = smul.addr %s237, 4
      %s239 = scalar_lea.vmem %s1, %s238
      %p240 = pneg %p80
      %p241 = pneg %p77
      %p242 = pneg %p101
      %p243 = pneg %p98
      %p244 = pneg %p122
      %p245 = pneg %p119
      %p246 = pneg %p150
      %p247 = pneg %p147
      %s248 = sadd.s32 %s21, %s22
      %p249 = scmp.lt.s32.totalorder %s248, 1
      %s250 = scalar_select %p249, %s248, 1
      %s251 = smul.addr %s250, 8
      %s252 = scalar_lea.vmem %s4, %s251
      %p253 = pneg %p178
      %p254 = pneg %p175
      %s255 = sadd.s32 %s21, %s22
      %p256 = scmp.lt.s32.totalorder %s255, 1
      %s257 = scalar_select %p256, %s255, 1
      %s258 = smul.addr %s257, 4
      %s259 = scalar_lea.vmem %s5, %s258
      %s260 = sadd.s32 %s21, %s22
      %p261 = scmp.lt.s32.totalorder %s260, 1
      %s262 = scalar_select %p261, %s260, 1
      %s263 = smul.addr %s262, 8
      %s264 = scalar_lea.vmem %s0, %s263
      %s265 = sadd.s32 %s21, %s22
      %s266 = sadd.s32 %s21, %s22
      %p267 = scmp.lt.s32.totalorder %s266, 1
      %s268 = scalar_select %p267, %s266, 1
      %s269 = smul.addr %s268, 4
      %s270 = scalar_lea.vmem %s1, %s269
      %s271 = sadd.s32 %s21, %s22
      %s272 = sadd.s32 %s21, %s22
      %p273 = scmp.lt.s32.totalorder %s272, 1
      %s274 = scalar_select %p273, %s272, 1
      %s275 = smul.addr %s274, 8
      %s276 = scalar_lea.vmem %s4, %s275
      %s277 = sadd.s32 %s21, %s22
      %s278 = sadd.s32 %s21, %s22
      %p279 = scmp.lt.s32.totalorder %s278, 1
      %s280 = scalar_select %p279, %s278, 1
      %s281 = smul.addr %s280, 4
      %s282 = scalar_lea.vmem %s5, %s281
      %s283 = sadd.s32 %s21, %s22
      %v284 = vld [vmem:[%s270] sm:$0xf]
      %v285 = vld [vmem:[%s264] sm:$0xff]
      %v286 = vunpack.c.l.bf16 %v284
      %v287 = vadd.f32 %v285, %v286
      %vm288 = vcmask 261120
      %v289 = vsel %vm288, %v287, 0.0
      %290 = vadd.xlane.f32.xlu0 %v289
      %v291 = vpop.xlane.xlu0 %290
      %v292 = vrcp.pop 32.0
      %v293 = vmul.f32 %v291, %v292
      %v294 = vsub.f32 %v287, %v293
      %v295 = vmul.f32 %v294, %v294
      %v296 = vsel %vm288, %v295, 0.0
      %297 = vadd.xlane.f32.xlu0 %v296
      %v298 = vpop.xlane.xlu0 %297
      %v299 = vmul.f32 %v298, %v292
      %v300 = vadd.f32 %v299, 1e-05
      %v301 = vrsqrt.pop %v300
      %v302 = vmul.f32 %v294, %v301
      %v303 = vld [vmem:[%s2] sm:$0x1]
      %v305 = vlaneseq
      %v306 = vshrl.u32 %v305, 7
      %v307 = vsub.s32 0, %v306
      %v308 = vrot.slane %v303, %v307
      %v310 = vmul.f32 %v302, %v308
      %v311 = vld [vmem:[%s3] sm:$0x1]
      %v313 = vlaneseq
      %v314 = vshrl.u32 %v313, 7
      %v315 = vsub.s32 0, %v314
      %v316 = vrot.slane %v311, %v315
      %v318 = vadd.f32 %v310, %v316
      %319 = vst.msk [vmem:[%s276] sm:$0xff] %vm288, %v318
      %v320 = vpack.c.bf16 %v318, %v318
      %vm321 = vcmask 257024
      %322 = vst.msk [vmem:[%s282] sm:$0xf] %vm321, %v320
      %s323 = sadd.s32 %s21, %s22
      %p324 = scmp.lt.s32.totalorder %s323, 1
      %s325 = scalar_select %p324, %s323, 1
      %s326 = smul.addr %s325, 8
      %s327 = scalar_lea.vmem %s4, %s326
      %s328 = sadd.s32 %s21, %s22
      %p329 = scmp.lt.s32.totalorder %s328, 1
      %s330 = scalar_select %p329, %s328, 1
      %s331 = smul.addr %s330, 4
      %s332 = scalar_lea.vmem %s5, %s331
      // Predicated region
      $region37: #{gpt_forward.20} parent=35 // pred_check
        %p333 = pneg %p147
      $region38: #{gpt_forward.20} parent=35 // pred_check_branch
        %335 = sbr.rel (%p333) target = $region40
      $region39: #{gpt_forward.20} parent=35 // pred_region
        %s336 = sadd.s32 %s21, %s22
      $region40: #{gpt_forward.20} parent=35 // pred_fallthru
        _
      // Predicated region
      $region41: #{gpt_forward.20} parent=35 // pred_check
        %p337 = pneg %p175
      $region42: #{gpt_forward.20} parent=35 // pred_check_branch
        %339 = sbr.rel (%p337) target = $region44
      $region43: #{gpt_forward.20} parent=35 // pred_region
        %s340 = sadd.s32 %s21, %s22
      $region44: #{gpt_forward.20} parent=35 // pred_fallthru
        _
    $region36: #{gpt_forward.20} parent=5 // pred_fallthru
      _
    %p341 = scmp.le.s32.totalorder 2, %s12
    // Predicated region
    $region45: #{gpt_forward.20} parent=5 // pred_check
      %p342 = pneg %p341
    $region46: #{gpt_forward.20} parent=5 // pred_check_branch
      %344 = sbr.rel (%p342) target = $region48
    $region47: #{gpt_forward.20} parent=5 // pred_region
      %s345 = ssub.s32 %s12, 2
      // Predicated region
      $region49: #{gpt_forward.20} parent=47 // pred_check
        %p346 = pneg %p153
      $region50: #{gpt_forward.20} parent=47 // pred_check_branch
        %348 = sbr.rel (%p346) target = $region52
      $region51: #{gpt_forward.20} parent=47 // pred_region
        %s349 = sadd.s32 %s23, %s24
        %p350 = scmp.lt.s32.totalorder %s349, 1
        %s351 = scalar_select %p350, %s349, 1
        %s352 = smul.addr %s351, 8
        %s353 = scalar_lea.vmem %s4, %s352
      $region52: #{gpt_forward.20} parent=47 // pred_fallthru
        _
      // Predicated region
      $region53: #{gpt_forward.20} parent=47 // pred_check
        %p354 = pneg %p181
      $region54: #{gpt_forward.20} parent=47 // pred_check_branch
        %356 = sbr.rel (%p354) target = $region56
      $region55: #{gpt_forward.20} parent=47 // pred_region
        %s357 = sadd.s32 %s23, %s24
        %p358 = scmp.lt.s32.totalorder %s357, 1
        %s359 = scalar_select %p358, %s357, 1
        %s360 = smul.addr %s359, 4
        %s361 = scalar_lea.vmem %s5, %s360
      $region56: #{gpt_forward.20} parent=47 // pred_fallthru
        _
    $region48: #{gpt_forward.20} parent=5 // pred_fallthru
      _
  $region6: #{gpt_forward.20} parent=0 // loop_footer
    %s16 = sadd.s32 1, %s12
  $region7: #{gpt_forward.20} parent=0 // loop_footer_branch
    %11 = sbr.rel target = $region3
  $region8: #{gpt_forward.20} parent=0 // loop_exit
    _

// kernel: gpt_forward.27
$region0: #{gpt_forward.27}
  #allocation0 [shape = 'u32[]', space=smem, size = 0x4, offset = 0x4, fixed_abs, tag = 'smem constant byte address 0x4 - core index']
  #allocation1 [shape = 'u32[144,128]{1,0:T(1,128)}', space=vmem, size = 0x12000, scoped, tag = 'internal scratch']
  %s0 = inlined_call_operand.vmem [shape: f32[16,32], index: 0, kind: input, shape index: {}]
  %s1 = inlined_call_operand.vmem [shape: bf16[16,32], index: 1, kind: input, shape index: {}]
  %s2 = inlined_call_operand.vmem [shape: f32[1,32], index: 2, kind: input, shape index: {}]
  %s3 = inlined_call_operand.vmem [shape: f32[1,32], index: 3, kind: input, shape index: {}]
  %s4 = inlined_call_operand.hbm [shape: f32[16,32], index: 4, kind: output, shape index: {0}]
  %s5 = inlined_call_operand.hbm [shape: bf16[16,32], index: 5, kind: output, shape index: {1}]
  %6 = xla_tuple %s4, %s5
  %s7 = sld [smem:[#allocation0]]
  $region57: #{gpt_forward.27} parent=0
    _
  %s9 = ssub.s32 1, %s7
  %s10 = scalar_select 0, %s9, %s7
  $region1: #{gpt_forward.27} parent=0
    #allocation2 [shape = 'u8[8192]{0}', space=vmem, size = 0x2000, scoped, tag = 'output window, operand 0']
    #allocation3 [shape = 's32[2]{0}', space=sflag, size = 0x8, scoped, tag = 'scoped memory for gpt_forward.27']
    #allocation4 [shape = 'u8[4096]{0}', space=vmem, size = 0x1000, scoped, tag = 'output window, operand 1']
    #allocation5 [shape = 's32[2]{0}', space=sflag, size = 0x8, scoped, tag = 'scoped memory for gpt_forward.27']
    %11 = vsyncpa [#allocation3], 0
    %s12 = scalar_lea.sflag [#allocation3], 1
    %13 = vsyncpa %s12, 0
    %14 = vsyncpa [#allocation5], 0
    %s15 = scalar_lea.sflag [#allocation5], 1
    %16 = vsyncpa %s15, 0
    loop: start=0, step=1, limit=4
    $region2: #{gpt_forward.27} parent=1 // loop_pre_header
      _
    $region3: #{gpt_forward.27} parent=1 // loop_header
      %s18 = sphi 0, %s22
      %p19 = scmp.ge.s32.totalorder %s18, 4
      %s25 = sphi 0, %s37
      %s26 = sphi 0, %s33
      %s27 = sphi 0, %s25
      %s28 = sphi 0, %s26
      %s29 = sphi 0, %s27
      %s30 = sphi 0, %s28
      %s42 = sphi 0, %s44
      %s45 = sphi 0, %s42
      %s46 = sphi 0, %s45
      %s62 = sphi 0, %s46
      %s70 = sphi 0, %s72
      %s73 = sphi 0, %s70
      %s74 = sphi 0, %s73
      %s90 = sphi 0, %s74
      %s94 = sphi 0, %s94
      %s96 = sphi 0, %s94
      %s97 = sphi 0, %s96
      %s111 = sphi 0, %s97
      %s115 = sphi 0, %s115
      %s117 = sphi 0, %s115
      %s118 = sphi 0, %s117
      %s132 = sphi 0, %s118
      %s140 = sphi 0, %s142
      %s143 = sphi 0, %s140
      %s144 = sphi 0, %s143
      %s160 = sphi 0, %s144
      %s168 = sphi 0, %s170
      %s171 = sphi 0, %s168
      %s172 = sphi 0, %s171
      %s188 = sphi 0, %s172
    $region4: #{gpt_forward.27} parent=1 // loop_header_branch
      %21 = sbr.rel (%p19) target = $region8
    $region5: #{gpt_forward.27} parent=1 // loop_body
      %s23 = ssub.s32 %s18, 1
      %s24 = ssub.s32 %s18, 2
      %s31 = sadd.s32 1, %s26
      %p32 = scmp.ge.s32.totalorder %s31, 1
      %s33 = scalar_select %p32, 0, %s31
      %s34 = sadd.s32 1, %s25
      %s35 = scalar_select %p32, %s34, %s25
      %p36 = scmp.ge.s32.totalorder %s35, 2
      %s37 = scalar_select %p36, 0, %s35
      %s38 = sadd.s32 %s25, %s26
      %s39 = sadd.s32 %s37, %s33
      %s40 = ssub.s32 %s38, %s39
      %p41 = scmp.eq.s32.totalorder %s40, 0
      %s43 = sadd.s32 %s42, 1
      %s44 = scalar_select %p41, %s42, %s43
      %p47 = pneg %p41
      %p48 = scmp.eq.s32.totalorder %s18, 1
      %p49 = por %p47, %p48
      %p50 = scmp.ne.s32.totalorder %s42, %s45
      %p51 = scmp.eq.s32.totalorder %s18, 0
      %p52 = por %p50, %p51
      %p53 = scmp.ne.s32.totalorder %s42, %s45
      %p54 = scmp.eq.s32.totalorder %s23, 1
      %p55 = por %p53, %p54
      %p56 = scmp.ne.s32.totalorder %s45, %s46
      %p57 = scmp.eq.s32.totalorder %s23, 0
      %p58 = por %p56, %p57
      %p59 = scmp.ne.s32.totalorder %s45, %s46
      %p60 = scmp.eq.s32.totalorder %s24, 1
      %p61 = por %p59, %p60
      %p63 = scmp.ne.s32.totalorder %s46, %s62
      %p64 = scmp.eq.s32.totalorder %s24, 0
      %p65 = por %p63, %p64
      %s66 = sadd.s32 %s25, %s26
      %s67 = sadd.s32 %s37, %s33
      %s68 = ssub.s32 %s66, %s67
      %p69 = scmp.eq.s32.totalorder %s68, 0
      %s71 = sadd.s32 %s70, 1
      %s72 = scalar_select %p69, %s70, %s71
      %p75 = pneg %p69
      %p76 = scmp.eq.s32.totalorder %s18, 1
      %p77 = por %p75, %p76
      %p78 = scmp.ne.s32.totalorder %s70, %s73
      %p79 = scmp.eq.s32.totalorder %s18, 0
      %p80 = por %p78, %p79
      %p81 = scmp.ne.s32.totalorder %s70, %s73
      %p82 = scmp.eq.s32.totalorder %s23, 1
      %p83 = por %p81, %p82
      %p84 = scmp.ne.s32.totalorder %s73, %s74
      %p85 = scmp.eq.s32.totalorder %s23, 0
      %p86 = por %p84, %p85
      %p87 = scmp.ne.s32.totalorder %s73, %s74
      %p88 = scmp.eq.s32.totalorder %s24, 1
      %p89 = por %p87, %p88
      %p91 = scmp.ne.s32.totalorder %s74, %s90
      %p92 = scmp.eq.s32.totalorder %s24, 0
      %p93 = por %p91, %p92
      %s95 = sadd.s32 %s94, 1
      %p98 = scmp.eq.s32.totalorder %s18, 1
      %p99 = scmp.ne.s32.totalorder %s94, %s96
      %p100 = scmp.eq.s32.totalorder %s18, 0
      %p101 = por %p99, %p100
      %p102 = scmp.ne.s32.totalorder %s94, %s96
      %p103 = scmp.eq.s32.totalorder %s23, 1
      %p104 = por %p102, %p103
      %p105 = scmp.ne.s32.totalorder %s96, %s97
      %p106 = scmp.eq.s32.totalorder %s23, 0
      %p107 = por %p105, %p106
      %p108 = scmp.ne.s32.totalorder %s96, %s97
      %p109 = scmp.eq.s32.totalorder %s24, 1
      %p110 = por %p108, %p109
      %p112 = scmp.ne.s32.totalorder %s97, %s111
      %p113 = scmp.eq.s32.totalorder %s24, 0
      %p114 = por %p112, %p113
      %s116 = sadd.s32 %s115, 1
      %p119 = scmp.eq.s32.totalorder %s18, 1
      %p120 = scmp.ne.s32.totalorder %s115, %s117
      %p121 = scmp.eq.s32.totalorder %s18, 0
      %p122 = por %p120, %p121
      %p123 = scmp.ne.s32.totalorder %s115, %s117
      %p124 = scmp.eq.s32.totalorder %s23, 1
      %p125 = por %p123, %p124
      %p126 = scmp.ne.s32.totalorder %s117, %s118
      %p127 = scmp.eq.s32.totalorder %s23, 0
      %p128 = por %p126, %p127
      %p129 = scmp.ne.s32.totalorder %s117, %s118
      %p130 = scmp.eq.s32.totalorder %s24, 1
      %p131 = por %p129, %p130
      %p133 = scmp.ne.s32.totalorder %s118, %s132
      %p134 = scmp.eq.s32.totalorder %s24, 0
      %p135 = por %p133, %p134
      %s136 = sadd.s32 %s25, %s26
      %s137 = sadd.s32 %s37, %s33
      %s138 = ssub.s32 %s136, %s137
      %p139 = scmp.eq.s32.totalorder %s138, 0
      %s141 = sadd.s32 %s140, 1
      %s142 = scalar_select %p139, %s140, %s141
      %p145 = pneg %p139
      %p146 = scmp.eq.s32.totalorder %s18, 1
      %p147 = por %p145, %p146
      %p148 = scmp.ne.s32.totalorder %s140, %s143
      %p149 = scmp.eq.s32.totalorder %s18, 0
      %p150 = por %p148, %p149
      %p151 = scmp.ne.s32.totalorder %s140, %s143
      %p152 = scmp.eq.s32.totalorder %s23, 1
      %p153 = por %p151, %p152
      %p154 = scmp.ne.s32.totalorder %s143, %s144
      %p155 = scmp.eq.s32.totalorder %s23, 0
      %p156 = por %p154, %p155
      %p157 = scmp.ne.s32.totalorder %s143, %s144
      %p158 = scmp.eq.s32.totalorder %s24, 1
      %p159 = por %p157, %p158
      %p161 = scmp.ne.s32.totalorder %s144, %s160
      %p162 = scmp.eq.s32.totalorder %s24, 0
      %p163 = por %p161, %p162
      %s164 = sadd.s32 %s25, %s26
      %s165 = sadd.s32 %s37, %s33
      %s166 = ssub.s32 %s164, %s165
      %p167 = scmp.eq.s32.totalorder %s166, 0
      %s169 = sadd.s32 %s168, 1
      %s170 = scalar_select %p167, %s168, %s169
      %p173 = pneg %p167
      %p174 = scmp.eq.s32.totalorder %s18, 1
      %p175 = por %p173, %p174
      %p176 = scmp.ne.s32.totalorder %s168, %s171
      %p177 = scmp.eq.s32.totalorder %s18, 0
      %p178 = por %p176, %p177
      %p179 = scmp.ne.s32.totalorder %s168, %s171
      %p180 = scmp.eq.s32.totalorder %s23, 1
      %p181 = por %p179, %p180
      %p182 = scmp.ne.s32.totalorder %s171, %s172
      %p183 = scmp.eq.s32.totalorder %s23, 0
      %p184 = por %p182, %p183
      %p185 = scmp.ne.s32.totalorder %s171, %s172
      %p186 = scmp.eq.s32.totalorder %s24, 1
      %p187 = por %p185, %p186
      %p189 = scmp.ne.s32.totalorder %s172, %s188
      %p190 = scmp.eq.s32.totalorder %s24, 0
      %p191 = por %p189, %p190
      %p192 = scmp.le.s32.totalorder 1, %s18
      %p193 = scmp.lt.s32.totalorder %s18, 3
      %p194 = pnand %p192, %p193
      %p195 = pneg %p194
      // Predicated region
      $region9: #{gpt_forward.27} parent=5 // pred_check
        _
      $region10: #{gpt_forward.27} parent=5 // pred_check_branch
        %197 = sbr.rel (%p194) target = $region12
      $region11: #{gpt_forward.27} parent=5 // pred_region
        %s198 = ssub.s32 %s18, 1
        // Predicated region
        $region13: #{gpt_forward.27} parent=11 // pred_check
          %p199 = pneg %p107
        $region14: #{gpt_forward.27} parent=11 // pred_check_branch
          %201 = sbr.rel (%p199) target = $region16
        $region15: #{gpt_forward.27} parent=11 // pred_region
          _
        $region16: #{gpt_forward.27} parent=11 // pred_fallthru
          _
        // Predicated region
        $region17: #{gpt_forward.27} parent=11 // pred_check
          %p202 = pneg %p128
        $region18: #{gpt_forward.27} parent=11 // pred_check_branch
          %204 = sbr.rel (%p202) target = $region20
        $region19: #{gpt_forward.27} parent=11 // pred_region
          _
        $region20: #{gpt_forward.27} parent=11 // pred_fallthru
          _
      $region12: #{gpt_forward.27} parent=5 // pred_fallthru
        _
      %p205 = scmp.lt.s32.totalorder %s18, 2
      // Predicated region
      $region21: #{gpt_forward.27} parent=5 // pred_check
        %p206 = pneg %p205
      $region22: #{gpt_forward.27} parent=5 // pred_check_branch
        %208 = sbr.rel (%p206) target = $region24
      $region23: #{gpt_forward.27} parent=5 // pred_region
        // Predicated region
        $region25: #{gpt_forward.27} parent=23 // pred_check
          %p209 = pneg %p52
        $region26: #{gpt_forward.27} parent=23 // pred_check_branch
          %211 = sbr.rel (%p209) target = $region28
        $region27: #{gpt_forward.27} parent=23 // pred_region
          %s212 = sadd.s32 %s25, %s26
          %p213 = scmp.lt.s32.totalorder %s212, 1
          %s214 = scalar_select %p213, %s212, 1
          %s215 = smul.addr %s214, 8
          %s216 = scalar_lea.vmem %s0, %s215
          %s217 = sadd.s32 %s25, %s26
        $region28: #{gpt_forward.27} parent=23 // pred_fallthru
          _
        // Predicated region
        $region29: #{gpt_forward.27} parent=23 // pred_check
          %p218 = pneg %p80
        $region30: #{gpt_forward.27} parent=23 // pred_check_branch
          %220 = sbr.rel (%p218) target = $region32
        $region31: #{gpt_forward.27} parent=23 // pred_region
          %s221 = sadd.s32 %s25, %s26
          %p222 = scmp.lt.s32.totalorder %s221, 1
          %s223 = scalar_select %p222, %s221, 1
          %s224 = smul.addr %s223, 4
          %s225 = scalar_lea.vmem %s1, %s224
          %s226 = sadd.s32 %s25, %s26
        $region32: #{gpt_forward.27} parent=23 // pred_fallthru
          _
      $region24: #{gpt_forward.27} parent=5 // pred_fallthru
        _
      %p227 = scmp.le.s32.totalorder 1, %s18
      %p228 = scmp.lt.s32.totalorder %s18, 3
      %p229 = pnand %p227, %p228
      %p230 = pneg %p229
      // Predicated region
      $region33: #{gpt_forward.27} parent=5 // pred_check
        _
      $region34: #{gpt_forward.27} parent=5 // pred_check_branch
        %232 = sbr.rel (%p229) target = $region36
      $region35: #{gpt_forward.27} parent=5 // pred_region
        %s233 = ssub.s32 %s18, 1
        %s234 = sadd.s32 %s27, %s28
        %p235 = scmp.lt.s32.totalorder %s234, 1
        %s236 = scalar_select %p235, %s234, 1
        %s237 = smul.addr %s236, 8
        %s238 = scalar_lea.vmem %s0, %s237
        %p239 = pneg %p58
        %p240 = pneg %p55
        %s241 = sadd.s32 %s27, %s28
        %p242 = scmp.lt.s32.totalorder %s241, 1
        %s243 = scalar_select %p242, %s241, 1
        %s244 = smul.addr %s243, 4
        %s245 = scalar_lea.vmem %s1, %s244
        %p246 = pneg %p86
        %p247 = pneg %p83
        %p248 = pneg %p107
        %p249 = pneg %p104
        %p250 = pneg %p128
        %p251 = pneg %p125
        %p252 = pneg %p156
        %p253 = pneg %p153
        %s254 = sand.u32 %s143, 1
        %s255 = scalar_lea.sflag [#allocation3], %s254
        %s256 = sand.u32 %s143, 1
        %s257 = smul.addr %s256, 8
        %s258 = scalar_lea.vmem [#allocation2], %s257
        %p259 = pneg %p184
        %p260 = pneg %p181
        %s261 = sand.u32 %s171, 1
        %s262 = scalar_lea.sflag [#allocation5], %s261
        %s263 = sand.u32 %s171, 1
        %s264 = smul.addr %s263, 4
        %s265 = scalar_lea.vmem [#allocation4], %s264
        %s266 = sadd.s32 %s27, %s28
        %p267 = scmp.lt.s32.totalorder %s266, 1
        %s268 = scalar_select %p267, %s266, 1
        %s269 = smul.addr %s268, 8
        %s270 = scalar_lea.vmem %s0, %s269
        %s271 = sadd.s32 %s27, %s28
        %s272 = sadd.s32 %s27, %s28
        %p273 = scmp.lt.s32.totalorder %s272, 1
        %s274 = scalar_select %p273, %s272, 1
        %s275 = smul.addr %s274, 4
        %s276 = scalar_lea.vmem %s1, %s275
        %s277 = sadd.s32 %s27, %s28
        %s278 = sadd.s32 %s27, %s28
        %s279 = sadd.s32 %s27, %s28
        %v280 = vld [vmem:[%s276] sm:$0xf]
        %v281 = vld [vmem:[%s270] sm:$0xff]
        %v282 = vunpack.c.l.bf16 %v280
        %v283 = vadd.f32 %v281, %v282
        %vm284 = vcmask 261120
        %v285 = vsel %vm284, %v283, 0.0
        %286 = vadd.xlane.f32.xlu0 %v285
        %v287 = vpop.xlane.xlu0 %286
        %v288 = vrcp.pop 32.0
        %v289 = vmul.f32 %v287, %v288
        %v290 = vsub.f32 %v283, %v289
        %v291 = vmul.f32 %v290, %v290
        %v292 = vsel %vm284, %v291, 0.0
        %293 = vadd.xlane.f32.xlu0 %v292
        %v294 = vpop.xlane.xlu0 %293
        %v295 = vmul.f32 %v294, %v288
        %v296 = vadd.f32 %v295, 1e-05
        %v297 = vrsqrt.pop %v296
        %v298 = vmul.f32 %v290, %v297
        %v299 = vld [vmem:[%s2] sm:$0x1]
        %v301 = vlaneseq
        %v302 = vshrl.u32 %v301, 7
        %v303 = vsub.s32 0, %v302
        %v304 = vrot.slane %v299, %v303
        %v306 = vmul.f32 %v298, %v304
        %v307 = vld [vmem:[%s3] sm:$0x1]
        %v309 = vlaneseq
        %v310 = vshrl.u32 %v309, 7
        %v311 = vsub.s32 0, %v310
        %v312 = vrot.slane %v307, %v311
        %v314 = vadd.f32 %v306, %v312
        %315 = vst.msk [vmem:[%s258] sm:$0xff] %vm284, %v314
        %v316 = vpack.c.bf16 %v314, %v314
        %vm317 = vcmask 257024
        %318 = vst.msk [vmem:[%s265] sm:$0xf] %vm317, %v316
        %s319 = sand.u32 %s143, 1
        %s320 = scalar_lea.sflag [#allocation3], %s319
        %s321 = sand.u32 %s143, 1
        %s322 = smul.addr %s321, 8
        %s323 = scalar_lea.vmem [#allocation2], %s322
        %s324 = sand.u32 %s171, 1
        %s325 = scalar_lea.sflag [#allocation5], %s324
        %s326 = sand.u32 %s171, 1
        %s327 = smul.addr %s326, 4
        %s328 = scalar_lea.vmem [#allocation4], %s327
        // Predicated region
        $region37: #{gpt_forward.27} parent=35 // pred_check
          %p329 = pneg %p153
        $region38: #{gpt_forward.27} parent=35 // pred_check_branch
          %331 = sbr.rel (%p329) target = $region40
        $region39: #{gpt_forward.27} parent=35 // pred_region
          %s332 = sadd.s32 %s27, %s28
          %s334 = ssub.s32 128, 128
          %335 = vsyncadd %s320, %s334
          %s336 = smul.addr %s332, 128
          %s337 = scalar_lea.hbm %s4, %s336
          %s339 = sshll.u32 %s323, 4
          %s340 = int_to_ptr.vmem [resolvable:$true] %s339
          %342 = dma.vmem_to_hbm [thread:$0]  %s340, 128, %s337, %s320
        $region40: #{gpt_forward.27} parent=35 // pred_fallthru
          _
        // Predicated region
        $region41: #{gpt_forward.27} parent=35 // pred_check
          %p343 = pneg %p181
        $region42: #{gpt_forward.27} parent=35 // pred_check_branch
          %345 = sbr.rel (%p343) target = $region44
        $region43: #{gpt_forward.27} parent=35 // pred_region
          %s346 = sadd.s32 %s27, %s28
          %s348 = ssub.s32 64, 64
          %349 = vsyncadd %s325, %s348
          %s350 = smul.addr %s346, 64
          %s351 = scalar_lea.hbm %s5, %s350
          %s353 = sshll.u32 %s328, 4
          %s354 = int_to_ptr.vmem [resolvable:$true] %s353
          %356 = dma.vmem_to_hbm [thread:$0]  %s354, 64, %s351, %s325
        $region44: #{gpt_forward.27} parent=35 // pred_fallthru
          _
      $region36: #{gpt_forward.27} parent=5 // pred_fallthru
        _
      %p357 = scmp.le.s32.totalorder 2, %s18
      // Predicated region
      $region45: #{gpt_forward.27} parent=5 // pred_check
        %p358 = pneg %p357
      $region46: #{gpt_forward.27} parent=5 // pred_check_branch
        %360 = sbr.rel (%p358) target = $region48
      $region47: #{gpt_forward.27} parent=5 // pred_region
        %s361 = ssub.s32 %s18, 2
        // Predicated region
        $region49: #{gpt_forward.27} parent=47 // pred_check
          %p362 = pneg %p159
        $region50: #{gpt_forward.27} parent=47 // pred_check_branch
          %364 = sbr.rel (%p362) target = $region52
        $region51: #{gpt_forward.27} parent=47 // pred_region
          %s365 = sand.u32 %s144, 1
          %s366 = scalar_lea.sflag [#allocation3], %s365
          %s367 = sand.u32 %s144, 1
          %s368 = smul.addr %s367, 8
          %s369 = scalar_lea.vmem [#allocation2], %s368
          %370 = dma.done %s366, 128
        $region52: #{gpt_forward.27} parent=47 // pred_fallthru
          _
        // Predicated region
        $region53: #{gpt_forward.27} parent=47 // pred_check
          %p371 = pneg %p187
        $region54: #{gpt_forward.27} parent=47 // pred_check_branch
          %373 = sbr.rel (%p371) target = $region56
        $region55: #{gpt_forward.27} parent=47 // pred_region
          %s374 = sand.u32 %s172, 1
          %s375 = scalar_lea.sflag [#allocation5], %s374
          %s376 = sand.u32 %s172, 1
          %s377 = smul.addr %s376, 4
          %s378 = scalar_lea.vmem [#allocation4], %s377
          %379 = dma.done %s375, 64
        $region56: #{gpt_forward.27} parent=47 // pred_fallthru
          _
      $region48: #{gpt_forward.27} parent=5 // pred_fallthru
        _
    $region6: #{gpt_forward.27} parent=1 // loop_footer
      %s22 = sadd.s32 1, %s18
    $region7: #{gpt_forward.27} parent=1 // loop_footer_branch
      %17 = sbr.rel target = $region3
    $region8: #{gpt_forward.27} parent=1 // loop_exit
      _
    %380 = vsyncpa [#allocation3], 1
    %s381 = scalar_lea.sflag [#allocation3], 1
    %382 = vsyncpa %s381, 1
    %383 = vsyncpa [#allocation5], 1
    %s384 = scalar_lea.sflag [#allocation5], 1
    %385 = vsyncpa %s384, 1

</llo_original>
